<compile_context>
chip_gen: v7x
topology: tpu7x:2x2x1
jax: 0.10.0
libtpu: 0.0.40
codegen_flags: <defaults>
</compile_context>

<pallas_src>
import functools
import math

import jax
import jax.numpy as jnp
from jax.experimental import pallas as pl
from jax.experimental.pallas import tpu as pltpu


def _layernorm(x, g, b, eps=1e-5):
    mu = jnp.mean(x, axis=-1, keepdims=True)
    var = jnp.mean(jnp.square(x - mu), axis=-1, keepdims=True)
    return (x - mu) * jax.lax.rsqrt(var + eps) * g + b


def _transformer_layer_kernel(
    qk_ref, v_ref,
    wk_ref, bk_ref, wv_ref, bv_ref, wo_ref, bo_ref,
    ln1_g_ref, ln1_b_ref,
    w1_ref, b1_ref, w2_ref, b2_ref,
    ln2_g_ref, ln2_b_ref,
    o_ref,
    *, n_heads, d_k, neg_slopes, mask_flag, zero_pad, apply_pos):
    Bt, S, D = qk_ref.shape
    H = n_heads
    N = Bt * S

    x_qk = qk_ref[...]                     # (Bt,S,D) f32 residual source (== key/query input)
    x_v = v_ref[...]

    xq2 = x_qk.reshape(N, D).astype(jnp.bfloat16)
    xv2 = x_v.reshape(N, D).astype(jnp.bfloat16)

    # Full-width projections: (N,D)@(D,D), bf16 in / f32 MXU accumulation.
    # d_k**-0.25 is folded into wk/bk host-side (K == Q here => scores get 1/sqrt(d_k)).
    q_all = jnp.dot(xq2, wk_ref[...], preferred_element_type=jnp.float32) + bk_ref[...]  # (N,D)
    v_all = jnp.dot(xv2, wv_ref[...], preferred_element_type=jnp.float32) + bv_ref[...]  # (N,D)

    # Single bf16 cast, then per-head lane slices (no 4D transposes, no broadcast copies).
    q3b = q_all.astype(jnp.bfloat16).reshape(Bt, S, D)
    v3b = v_all.astype(jnp.bfloat16).reshape(Bt, S, D)

    # ALiBi + causal mask material built once per grid step (slopes are compile-time consts).
    qi = jax.lax.broadcasted_iota(jnp.int32, (S, S), 0)
    ki = jax.lax.broadcasted_iota(jnp.int32, (S, S), 1)
    rel = jnp.abs(qi - ki).astype(jnp.float32)
    # mask=1: attend to j<=i ; mask=0: strictly j<i (torch triu(k=mask)==0 semantics).
    allowed = (ki <= qi) if mask_flag == 1 else (ki < qi)
    if zero_pad:
        keep = (jax.lax.broadcasted_iota(jnp.int32, (S, 1), 0) != 0).astype(jnp.float32)

    outs = []
    for h in range(H):                                     # small static loop over heads
        qh = q3b[:, :, h * d_k:(h + 1) * d_k]              # (Bt,S,d_k) bf16
        vh = v3b[:, :, h * d_k:(h + 1) * d_k]
        # Masked ALiBi bias: adding -1e32 reproduces torch's masked_fill(-1e32) exactly in f32
        # (including the fully-masked row 0 of the mask=0 case).
        bias_h = jnp.where(allowed, neg_slopes[h] * rel, -1e32)        # (S,S) f32

        s = jnp.einsum('bqd,bkd->bqk', qh, qh,
                       preferred_element_type=jnp.float32)             # (Bt,S,S), K == Q
        s = s + bias_h[None]
        s = s - jnp.max(s, axis=-1, keepdims=True)
        p = jnp.exp(s)
        p = p * (1.0 / jnp.sum(p, axis=-1, keepdims=True))             # exact reciprocal
        if zero_pad:
            p = p * keep[None]                                         # zero prob row 0

        oh = jnp.einsum('bqk,bkd->bqd', p.astype(jnp.bfloat16), vh,
                        preferred_element_type=jnp.float32)            # (Bt,S,d_k)
        outs.append(oh.astype(jnp.bfloat16))

    # Concat heads, then a single full-depth out-projection (N,D)@(D,D).
    concat = jnp.concatenate(outs, axis=-1).reshape(N, D)              # (N,D) bf16
    attn = jnp.dot(concat, wo_ref[...],
                   preferred_element_type=jnp.float32) + bo_ref[...]   # (N,D) f32

    # residual + LayerNorm1 (dropout == identity in eval mode)
    x = x_qk + attn.reshape(Bt, S, D)
    x = _layernorm(x, ln1_g_ref[...], ln1_b_ref[...])

    if apply_pos:
        x2 = x.reshape(N, D)
        h1 = jnp.dot(x2.astype(jnp.bfloat16), w1_ref[...],
                     preferred_element_type=jnp.float32) + b1_ref[...]
        h1 = jnp.maximum(h1, 0.0)
        ff = jnp.dot(h1.astype(jnp.bfloat16), w2_ref[...],
                     preferred_element_type=jnp.float32) + b2_ref[...]
        x = _layernorm(x + ff.reshape(Bt, S, D), ln2_g_ref[...], ln2_b_ref[...])

    o_ref[...] = x


def _pick_bt(B, S, D, H, dff):
    """Largest divisor of B under a VMEM working-set budget; keep >=2 grid programs
    when possible so both v7x TensorCores get work (grid is a cheap loop on 1-TC chips)."""
    def est_bytes(bt):
        n = bt * S
        acts = 6 * bt * S * D * 4                              # 2 in x2buf + out x2buf (f32)
        proj = n * D * (4 + 4 + 2 + 2)                          # Q,V f32 + bf16 copies
        att = bt * H * S * S * (4 + 4 + 2) + H * S * S * 4      # scores/probs/bf16 probs + bias
        tail = n * D * (4 + 2) + n * dff * (4 + 2)              # attn/concat + FFN hidden
        wts = 2 * 2 * (3 * D * D + 2 * D * dff)                 # double-buffered bf16 weights
        return acts + proj + att + tail + wts

    best = 1
    for bt in range(1, B + 1):
        if B % bt:
            continue
        if B >= 2 and B // bt < 2:
            continue
        if est_bytes(bt) > 24 * 1024 * 1024:
            continue
        best = max(best, bt)
    return best


def transformer_layer(qk, v, p, *, n_heads, mask_flag, zero_pad, apply_pos):
    """One TransformerLayer forward as a single Pallas kernel, grid over batch blocks.

    `qk` is the query (== key) input, `v` the values input.
    """
    B, S, D = qk.shape
    assert D % n_heads == 0
    d_k = D // n_heads
    dff = p['w1'].shape[1]
    bt = _pick_bt(B, S, D, n_heads, dff)

    neg_slopes = tuple(-s for s in _get_slopes(n_heads))   # compile-time ALiBi constants

    kernel = functools.partial(
        _transformer_layer_kernel,
        n_heads=n_heads, d_k=d_k, neg_slopes=neg_slopes,
        mask_flag=mask_flag, zero_pad=zero_pad, apply_pos=apply_pos)

    def const_spec(arr):
        nd = arr.ndim
        return pl.BlockSpec(arr.shape, lambda b, _nd=nd: (0,) * _nd)

    act_spec = pl.BlockSpec((bt, S, D), lambda b: (b, 0, 0))

    args = (qk, v,
            p['wk'], p['bk'], p['wv'], p['bv'], p['wo'], p['bo'],
            p['ln1_g'], p['ln1_b'],
            p['w1'], p['b1'], p['w2'], p['b2'],
            p['ln2_g'], p['ln2_b'])

    in_specs = [act_spec, act_spec] + [const_spec(a) for a in args[2:]]

    return pl.pallas_call(
        kernel,
        out_shape=jax.ShapeDtypeStruct((B, S, D), jnp.float32),
        grid=(B // bt,),
        in_specs=in_specs,
        out_specs=pl.BlockSpec((bt, S, D), lambda b: (b, 0, 0)),
        compiler_params=pltpu.CompilerParams(
            dimension_semantics=("parallel",),
            vmem_limit_bytes=40 * 1024 * 1024),
    )(*args)


# ---------------- parameter construction (plain JAX glue, host-side) -------------


def _get_slopes(n):
    def pow2_slopes(n):
        start = 2 ** (-2 ** (-(math.log2(n) - 3)))
        return [start * start ** i for i in range(n)]
    if math.log2(n).is_integer():
        return pow2_slopes(n)
    c = 2 ** math.floor(math.log2(n))
    return pow2_slopes(c) + _get_slopes(2 * c)[0::2][: n - c]


def _xavier(key, shape):
    fan_in, fan_out = shape
    limit = math.sqrt(6.0 / (fan_in + fan_out))
    return jax.random.uniform(key, shape, jnp.float32, -limit, limit)


def init_layer_params(key, d_model, d_ff):
    """Raw (torch-layout: y = x @ W + b) layer parameters, all float32."""
    ks = jax.random.split(key, 5)
    return dict(
        wk=_xavier(ks[0], (d_model, d_model)), bk=jnp.zeros((1, d_model), jnp.float32),
        wv=_xavier(ks[1], (d_model, d_model)), bv=jnp.zeros((1, d_model), jnp.float32),
        wo=_xavier(ks[2], (d_model, d_model)), bo=jnp.zeros((1, d_model), jnp.float32),
        ln1_g=jnp.ones((1, d_model), jnp.float32), ln1_b=jnp.zeros((1, d_model), jnp.float32),
        w1=_xavier(ks[3], (d_model, d_ff)), b1=jnp.zeros((1, d_ff), jnp.float32),
        w2=_xavier(ks[4], (d_ff, d_model)), b2=jnp.zeros((1, d_model), jnp.float32),
        ln2_g=jnp.ones((1, d_model), jnp.float32), ln2_b=jnp.zeros((1, d_model), jnp.float32),
    )


def prepare_layer_params(raw, n_heads):
    """Host-side one-time conversion to kernel layout: bf16 matmul weights, and the
    attention scale d_k**-0.25 folded into Wk/bk (valid ONLY because key == query and
    kq_same=1 in this Architecture, so scores = (cQ)(cQ)^T = QQ^T/sqrt(d_k))."""
    D = raw['wk'].shape[0]
    d_k = D // n_heads
    c = float(d_k) ** -0.25
    return dict(
        wk=(raw['wk'] * c).astype(jnp.bfloat16), bk=raw['bk'] * c,
        wv=raw['wv'].astype(jnp.bfloat16), bv=raw['bv'],
        wo=raw['wo'].astype(jnp.bfloat16), bo=raw['bo'],
        ln1_g=raw['ln1_g'], ln1_b=raw['ln1_b'],
        w1=raw['w1'].astype(jnp.bfloat16), b1=raw['b1'],
        w2=raw['w2'].astype(jnp.bfloat16), b2=raw['b2'],
        ln2_g=raw['ln2_g'], ln2_b=raw['ln2_b'],
    )


def architecture_forward(params, q_embed_data, qa_embed_data, pid_embed_data, *, n_heads):
    """Architecture.forward for model_type='extrakt', emb_type='qid'."""
    del pid_embed_data  # unused: emb_type 'qid' has no 'pdiff'

    y = qa_embed_data
    x = q_embed_data
    for p in params['blocks_1']:
        y = transformer_layer(y, y, p, n_heads=n_heads,
                              mask_flag=1, zero_pad=False, apply_pos=True)
    flag_first = True
    for p in params['blocks_2']:
        if flag_first:
            x = transformer_layer(x, x, p, n_heads=n_heads,
                                  mask_flag=1, zero_pad=False, apply_pos=False)
            flag_first = False
        else:
            x = transformer_layer(x, y, p, n_heads=n_heads,
                                  mask_flag=0, zero_pad=True, apply_pos=True)
            flag_first = True
    return x


if __name__ == "__main__":
    B, S, D, H, DFF = 2, 8, 32, 4, 64
    n_blocks = 1

    key = jax.random.PRNGKey(0)
    k_params, k_q, k_qa, k_pid = jax.random.split(key, 4)
    layer_keys = jax.random.split(k_params, n_blocks + 2 * n_blocks)

    raw1 = [init_layer_params(layer_keys[i], D, DFF) for i in range(n_blocks)]
    raw2 = [init_layer_params(layer_keys[n_blocks + i], D, DFF) for i in range(2 * n_blocks)]
    params = {
        'blocks_1': [prepare_layer_params(r, H) for r in raw1],
        'blocks_2': [prepare_layer_params(r, H) for r in raw2],
    }

    q_embed = jax.random.normal(k_q, (B, S, D), jnp.float32)
    qa_embed = jax.random.normal(k_qa, (B, S, D), jnp.float32)
    pid_embed = jax.random.normal(k_pid, (B, S, D), jnp.float32)

    out = architecture_forward(params, q_embed, qa_embed, pid_embed, n_heads=H)
    out = jax.block_until_ready(out)

    assert out.shape == (B, S, D), out.shape
    assert bool(jnp.all(jnp.isfinite(out)))
    print("KERNEL_OK")
</pallas_src>

<mosaic_0001>
module attributes {stable_mosaic.version = 11 : i64} {
  func.func @_transformer_layer_kernel(%arg0: i32, %arg1: memref<1x8x32xf32, #tpu.memory_space<vmem>>, %arg2: memref<1x8x32xf32, #tpu.memory_space<vmem>>, %arg3: memref<32x32xbf16, #tpu.memory_space<vmem>>, %arg4: memref<1x32xf32, #tpu.memory_space<vmem>>, %arg5: memref<32x32xbf16, #tpu.memory_space<vmem>>, %arg6: memref<1x32xf32, #tpu.memory_space<vmem>>, %arg7: memref<32x32xbf16, #tpu.memory_space<vmem>>, %arg8: memref<1x32xf32, #tpu.memory_space<vmem>>, %arg9: memref<1x32xf32, #tpu.memory_space<vmem>>, %arg10: memref<1x32xf32, #tpu.memory_space<vmem>>, %arg11: memref<32x64xbf16, #tpu.memory_space<vmem>>, %arg12: memref<1x64xf32, #tpu.memory_space<vmem>>, %arg13: memref<64x32xbf16, #tpu.memory_space<vmem>>, %arg14: memref<1x32xf32, #tpu.memory_space<vmem>>, %arg15: memref<1x32xf32, #tpu.memory_space<vmem>>, %arg16: memref<1x32xf32, #tpu.memory_space<vmem>>, %arg17: memref<1x8x32xf32, #tpu.memory_space<vmem>>) attributes {dimension_semantics = [#tpu.dimension_semantics<parallel>], iteration_bounds = array<i64: 2>, scalar_prefetch = 0 : i64, scratch_operands = 0 : i64, tpu.core_type = #tpu.core_type<tc>, window_params = [{transform_indices = @transform_0, window_bounds = array<i64: 1, 8, 32>}, {transform_indices = @transform_1, window_bounds = array<i64: 1, 8, 32>}, {pipeline_mode = #tpu.pipeline_mode<synchronous>, transform_indices = @transform_2, window_bounds = array<i64: 32, 32>}, {pipeline_mode = #tpu.pipeline_mode<synchronous>, transform_indices = @transform_3, window_bounds = array<i64: 1, 32>}, {pipeline_mode = #tpu.pipeline_mode<synchronous>, transform_indices = @transform_4, window_bounds = array<i64: 32, 32>}, {pipeline_mode = #tpu.pipeline_mode<synchronous>, transform_indices = @transform_5, window_bounds = array<i64: 1, 32>}, {pipeline_mode = #tpu.pipeline_mode<synchronous>, transform_indices = @transform_6, window_bounds = array<i64: 32, 32>}, {pipeline_mode = #tpu.pipeline_mode<synchronous>, transform_indices = @transform_7, window_bounds = array<i64: 1, 32>}, {pipeline_mode = #tpu.pipeline_mode<synchronous>, transform_indices = @transform_8, window_bounds = array<i64: 1, 32>}, {pipeline_mode = #tpu.pipeline_mode<synchronous>, transform_indices = @transform_9, window_bounds = array<i64: 1, 32>}, {pipeline_mode = #tpu.pipeline_mode<synchronous>, transform_indices = @transform_10, window_bounds = array<i64: 32, 64>}, {pipeline_mode = #tpu.pipeline_mode<synchronous>, transform_indices = @transform_11, window_bounds = array<i64: 1, 64>}, {pipeline_mode = #tpu.pipeline_mode<synchronous>, transform_indices = @transform_12, window_bounds = array<i64: 64, 32>}, {pipeline_mode = #tpu.pipeline_mode<synchronous>, transform_indices = @transform_13, window_bounds = array<i64: 1, 32>}, {pipeline_mode = #tpu.pipeline_mode<synchronous>, transform_indices = @transform_14, window_bounds = array<i64: 1, 32>}, {pipeline_mode = #tpu.pipeline_mode<synchronous>, transform_indices = @transform_15, window_bounds = array<i64: 1, 32>}, {transform_indices = @transform_16, window_bounds = array<i64: 1, 8, 32>}]} {
    %c0 = arith.constant 0 : index
    %c0_0 = arith.constant 0 : index
    %c0_1 = arith.constant 0 : index
    %0 = vector.load %arg1[%c0, %c0_0, %c0_1] : memref<1x8x32xf32, #tpu.memory_space<vmem>>, vector<1x8x32xf32>
    %c0_2 = arith.constant 0 : index
    %c0_3 = arith.constant 0 : index
    %c0_4 = arith.constant 0 : index
    %1 = vector.load %arg2[%c0_2, %c0_3, %c0_4] : memref<1x8x32xf32, #tpu.memory_space<vmem>>, vector<1x8x32xf32>
    %2 = vector.shape_cast %0 : vector<1x8x32xf32> to vector<8x32xf32>
    %3 = arith.truncf %2 : vector<8x32xf32> to vector<8x32xbf16>
    %4 = vector.shape_cast %1 : vector<1x8x32xf32> to vector<8x32xf32>
    %5 = arith.truncf %4 : vector<8x32xf32> to vector<8x32xbf16>
    %c0_5 = arith.constant 0 : index
    %c0_6 = arith.constant 0 : index
    %6 = vector.load %arg3[%c0_5, %c0_6] : memref<32x32xbf16, #tpu.memory_space<vmem>>, vector<32x32xbf16>
    %cst = arith.constant dense<0.000000e+00> : vector<8x32xf32>
    %7 = tpu.matmul %3, %6, %cst {dimension_numbers = #tpu.dot_dimension_numbers<[1], [0], [0], [1], [0, 0, 1, 1], [], []>} : vector<8x32xbf16>, vector<32x32xbf16>, vector<8x32xf32> -> vector<8x32xf32>
    %c0_7 = arith.constant 0 : index
    %c0_8 = arith.constant 0 : index
    %8 = vector.load %arg4[%c0_7, %c0_8] : memref<1x32xf32, #tpu.memory_space<vmem>>, vector<1x32xf32>
    %9 = vector.broadcast %8 : vector<1x32xf32> to vector<8x32xf32>
    %10 = arith.addf %7, %9 : vector<8x32xf32>
    %c0_9 = arith.constant 0 : index
    %c0_10 = arith.constant 0 : index
    %11 = vector.load %arg5[%c0_9, %c0_10] : memref<32x32xbf16, #tpu.memory_space<vmem>>, vector<32x32xbf16>
    %cst_11 = arith.constant dense<0.000000e+00> : vector<8x32xf32>
    %12 = tpu.matmul %5, %11, %cst_11 {dimension_numbers = #tpu.dot_dimension_numbers<[1], [0], [0], [1], [0, 0, 1, 1], [], []>} : vector<8x32xbf16>, vector<32x32xbf16>, vector<8x32xf32> -> vector<8x32xf32>
    %c0_12 = arith.constant 0 : index
    %c0_13 = arith.constant 0 : index
    %13 = vector.load %arg6[%c0_12, %c0_13] : memref<1x32xf32, #tpu.memory_space<vmem>>, vector<1x32xf32>
    %14 = vector.broadcast %13 : vector<1x32xf32> to vector<8x32xf32>
    %15 = arith.addf %12, %14 : vector<8x32xf32>
    %16 = arith.truncf %10 : vector<8x32xf32> to vector<8x32xbf16>
    %17 = vector.shape_cast %16 : vector<8x32xbf16> to vector<1x8x32xbf16>
    %18 = arith.truncf %15 : vector<8x32xf32> to vector<8x32xbf16>
    %19 = vector.shape_cast %18 : vector<8x32xbf16> to vector<1x8x32xbf16>
    %20 = tpu.iota {dimensions = array<i32: 0>} : vector<8x8xi32>
    %21 = tpu.iota {dimensions = array<i32: 1>} : vector<8x8xi32>
    %22 = arith.subi %20, %21 : vector<8x8xi32>
    %23 = math.absi %22 : vector<8x8xi32>
    %24 = arith.sitofp %23 : vector<8x8xi32> to vector<8x8xf32>
    %25 = arith.cmpi sle, %21, %20 : vector<8x8xi32>
    %26 = vector.extract_strided_slice %17 {offsets = [0, 0, 0], sizes = [1, 8, 8], strides = [1, 1, 1]} : vector<1x8x32xbf16> to vector<1x8x8xbf16>
    %27 = vector.extract_strided_slice %19 {offsets = [0, 0, 0], sizes = [1, 8, 8], strides = [1, 1, 1]} : vector<1x8x32xbf16> to vector<1x8x8xbf16>
    %cst_14 = arith.constant -2.500000e-01 : f32
    %28 = vector.broadcast %cst_14 : f32 to vector<8x8xf32>
    %29 = arith.mulf %28, %24 : vector<8x8xf32>
    %cst_15 = arith.constant -1.000000e+32 : f32
    %30 = vector.broadcast %cst_15 : f32 to vector<8x8xf32>
    %31 = arith.select %25, %29, %30 : vector<8x8xi1>, vector<8x8xf32>
    "tpu.trace_start"() <{level = 10 : i32, message = "bqd,bkd->bqk"}> : () -> ()
    %cst_16 = arith.constant dense<0.000000e+00> : vector<1x8x8xf32>
    %32 = tpu.matmul %26, %26, %cst_16 {dimension_numbers = #tpu.dot_dimension_numbers<[2], [2], [1], [1], [0, 0, 0, 1, 1, 1], [0], [0]>} : vector<1x8x8xbf16>, vector<1x8x8xbf16>, vector<1x8x8xf32> -> vector<1x8x8xf32>
    "tpu.trace_stop"() : () -> ()
    %33 = vector.shape_cast %31 : vector<8x8xf32> to vector<1x8x8xf32>
    %34 = arith.addf %32, %33 : vector<1x8x8xf32>
    %cst_17 = arith.constant dense<0xFF800000> : vector<1x8xf32>
    %35 = vector.multi_reduction <maximumf>, %34, %cst_17 [2] : vector<1x8x8xf32> to vector<1x8xf32>
    %36 = vector.shape_cast %35 : vector<1x8xf32> to vector<1x8x1xf32>
    %37 = vector.broadcast %36 : vector<1x8x1xf32> to vector<1x8x8xf32>
    %38 = arith.subf %34, %37 : vector<1x8x8xf32>
    %39 = math.exp %38 : vector<1x8x8xf32>
    %cst_18 = arith.constant dense<0.000000e+00> : vector<1x8xf32>
    %40 = vector.multi_reduction <add>, %39, %cst_18 [2] : vector<1x8x8xf32> to vector<1x8xf32>
    %41 = vector.shape_cast %40 : vector<1x8xf32> to vector<1x8x1xf32>
    %cst_19 = arith.constant 1.000000e+00 : f32
    %42 = vector.broadcast %cst_19 : f32 to vector<1x8x1xf32>
    %43 = arith.divf %42, %41 : vector<1x8x1xf32>
    %44 = vector.broadcast %43 : vector<1x8x1xf32> to vector<1x8x8xf32>
    %45 = arith.mulf %39, %44 : vector<1x8x8xf32>
    %46 = arith.truncf %45 : vector<1x8x8xf32> to vector<1x8x8xbf16>
    "tpu.trace_start"() <{level = 10 : i32, message = "bqk,bkd->bqd"}> : () -> ()
    %cst_20 = arith.constant dense<0.000000e+00> : vector<1x8x8xf32>
    %47 = tpu.matmul %46, %27, %cst_20 {dimension_numbers = #tpu.dot_dimension_numbers<[2], [1], [1], [2], [0, 0, 0, 1, 1, 2], [0], [0]>} : vector<1x8x8xbf16>, vector<1x8x8xbf16>, vector<1x8x8xf32> -> vector<1x8x8xf32>
    "tpu.trace_stop"() : () -> ()
    %48 = arith.truncf %47 : vector<1x8x8xf32> to vector<1x8x8xbf16>
    %49 = vector.extract_strided_slice %17 {offsets = [0, 0, 8], sizes = [1, 8, 8], strides = [1, 1, 1]} : vector<1x8x32xbf16> to vector<1x8x8xbf16>
    %50 = vector.extract_strided_slice %19 {offsets = [0, 0, 8], sizes = [1, 8, 8], strides = [1, 1, 1]} : vector<1x8x32xbf16> to vector<1x8x8xbf16>
    %cst_21 = arith.constant -6.250000e-02 : f32
    %51 = vector.broadcast %cst_21 : f32 to vector<8x8xf32>
    %52 = arith.mulf %51, %24 : vector<8x8xf32>
    %cst_22 = arith.constant -1.000000e+32 : f32
    %53 = vector.broadcast %cst_22 : f32 to vector<8x8xf32>
    %54 = arith.select %25, %52, %53 : vector<8x8xi1>, vector<8x8xf32>
    "tpu.trace_start"() <{level = 10 : i32, message = "bqd,bkd->bqk"}> : () -> ()
    %cst_23 = arith.constant dense<0.000000e+00> : vector<1x8x8xf32>
    %55 = tpu.matmul %49, %49, %cst_23 {dimension_numbers = #tpu.dot_dimension_numbers<[2], [2], [1], [1], [0, 0, 0, 1, 1, 1], [0], [0]>} : vector<1x8x8xbf16>, vector<1x8x8xbf16>, vector<1x8x8xf32> -> vector<1x8x8xf32>
    "tpu.trace_stop"() : () -> ()
    %56 = vector.shape_cast %54 : vector<8x8xf32> to vector<1x8x8xf32>
    %57 = arith.addf %55, %56 : vector<1x8x8xf32>
    %cst_24 = arith.constant dense<0xFF800000> : vector<1x8xf32>
    %58 = vector.multi_reduction <maximumf>, %57, %cst_24 [2] : vector<1x8x8xf32> to vector<1x8xf32>
    %59 = vector.shape_cast %58 : vector<1x8xf32> to vector<1x8x1xf32>
    %60 = vector.broadcast %59 : vector<1x8x1xf32> to vector<1x8x8xf32>
    %61 = arith.subf %57, %60 : vector<1x8x8xf32>
    %62 = math.exp %61 : vector<1x8x8xf32>
    %cst_25 = arith.constant dense<0.000000e+00> : vector<1x8xf32>
    %63 = vector.multi_reduction <add>, %62, %cst_25 [2] : vector<1x8x8xf32> to vector<1x8xf32>
    %64 = vector.shape_cast %63 : vector<1x8xf32> to vector<1x8x1xf32>
    %cst_26 = arith.constant 1.000000e+00 : f32
    %65 = vector.broadcast %cst_26 : f32 to vector<1x8x1xf32>
    %66 = arith.divf %65, %64 : vector<1x8x1xf32>
    %67 = vector.broadcast %66 : vector<1x8x1xf32> to vector<1x8x8xf32>
    %68 = arith.mulf %62, %67 : vector<1x8x8xf32>
    %69 = arith.truncf %68 : vector<1x8x8xf32> to vector<1x8x8xbf16>
    "tpu.trace_start"() <{level = 10 : i32, message = "bqk,bkd->bqd"}> : () -> ()
    %cst_27 = arith.constant dense<0.000000e+00> : vector<1x8x8xf32>
    %70 = tpu.matmul %69, %50, %cst_27 {dimension_numbers = #tpu.dot_dimension_numbers<[2], [1], [1], [2], [0, 0, 0, 1, 1, 2], [0], [0]>} : vector<1x8x8xbf16>, vector<1x8x8xbf16>, vector<1x8x8xf32> -> vector<1x8x8xf32>
    "tpu.trace_stop"() : () -> ()
    %71 = arith.truncf %70 : vector<1x8x8xf32> to vector<1x8x8xbf16>
    %72 = vector.extract_strided_slice %17 {offsets = [0, 0, 16], sizes = [1, 8, 8], strides = [1, 1, 1]} : vector<1x8x32xbf16> to vector<1x8x8xbf16>
    %73 = vector.extract_strided_slice %19 {offsets = [0, 0, 16], sizes = [1, 8, 8], strides = [1, 1, 1]} : vector<1x8x32xbf16> to vector<1x8x8xbf16>
    %cst_28 = arith.constant -1.562500e-02 : f32
    %74 = vector.broadcast %cst_28 : f32 to vector<8x8xf32>
    %75 = arith.mulf %74, %24 : vector<8x8xf32>
    %cst_29 = arith.constant -1.000000e+32 : f32
    %76 = vector.broadcast %cst_29 : f32 to vector<8x8xf32>
    %77 = arith.select %25, %75, %76 : vector<8x8xi1>, vector<8x8xf32>
    "tpu.trace_start"() <{level = 10 : i32, message = "bqd,bkd->bqk"}> : () -> ()
    %cst_30 = arith.constant dense<0.000000e+00> : vector<1x8x8xf32>
    %78 = tpu.matmul %72, %72, %cst_30 {dimension_numbers = #tpu.dot_dimension_numbers<[2], [2], [1], [1], [0, 0, 0, 1, 1, 1], [0], [0]>} : vector<1x8x8xbf16>, vector<1x8x8xbf16>, vector<1x8x8xf32> -> vector<1x8x8xf32>
    "tpu.trace_stop"() : () -> ()
    %79 = vector.shape_cast %77 : vector<8x8xf32> to vector<1x8x8xf32>
    %80 = arith.addf %78, %79 : vector<1x8x8xf32>
    %cst_31 = arith.constant dense<0xFF800000> : vector<1x8xf32>
    %81 = vector.multi_reduction <maximumf>, %80, %cst_31 [2] : vector<1x8x8xf32> to vector<1x8xf32>
    %82 = vector.shape_cast %81 : vector<1x8xf32> to vector<1x8x1xf32>
    %83 = vector.broadcast %82 : vector<1x8x1xf32> to vector<1x8x8xf32>
    %84 = arith.subf %80, %83 : vector<1x8x8xf32>
    %85 = math.exp %84 : vector<1x8x8xf32>
    %cst_32 = arith.constant dense<0.000000e+00> : vector<1x8xf32>
    %86 = vector.multi_reduction <add>, %85, %cst_32 [2] : vector<1x8x8xf32> to vector<1x8xf32>
    %87 = vector.shape_cast %86 : vector<1x8xf32> to vector<1x8x1xf32>
    %cst_33 = arith.constant 1.000000e+00 : f32
    %88 = vector.broadcast %cst_33 : f32 to vector<1x8x1xf32>
    %89 = arith.divf %88, %87 : vector<1x8x1xf32>
    %90 = vector.broadcast %89 : vector<1x8x1xf32> to vector<1x8x8xf32>
    %91 = arith.mulf %85, %90 : vector<1x8x8xf32>
    %92 = arith.truncf %91 : vector<1x8x8xf32> to vector<1x8x8xbf16>
    "tpu.trace_start"() <{level = 10 : i32, message = "bqk,bkd->bqd"}> : () -> ()
    %cst_34 = arith.constant dense<0.000000e+00> : vector<1x8x8xf32>
    %93 = tpu.matmul %92, %73, %cst_34 {dimension_numbers = #tpu.dot_dimension_numbers<[2], [1], [1], [2], [0, 0, 0, 1, 1, 2], [0], [0]>} : vector<1x8x8xbf16>, vector<1x8x8xbf16>, vector<1x8x8xf32> -> vector<1x8x8xf32>
    "tpu.trace_stop"() : () -> ()
    %94 = arith.truncf %93 : vector<1x8x8xf32> to vector<1x8x8xbf16>
    %95 = vector.extract_strided_slice %17 {offsets = [0, 0, 24], sizes = [1, 8, 8], strides = [1, 1, 1]} : vector<1x8x32xbf16> to vector<1x8x8xbf16>
    %96 = vector.extract_strided_slice %19 {offsets = [0, 0, 24], sizes = [1, 8, 8], strides = [1, 1, 1]} : vector<1x8x32xbf16> to vector<1x8x8xbf16>
    %cst_35 = arith.constant -3.906250e-03 : f32
    %97 = vector.broadcast %cst_35 : f32 to vector<8x8xf32>
    %98 = arith.mulf %97, %24 : vector<8x8xf32>
    %cst_36 = arith.constant -1.000000e+32 : f32
    %99 = vector.broadcast %cst_36 : f32 to vector<8x8xf32>
    %100 = arith.select %25, %98, %99 : vector<8x8xi1>, vector<8x8xf32>
    "tpu.trace_start"() <{level = 10 : i32, message = "bqd,bkd->bqk"}> : () -> ()
    %cst_37 = arith.constant dense<0.000000e+00> : vector<1x8x8xf32>
    %101 = tpu.matmul %95, %95, %cst_37 {dimension_numbers = #tpu.dot_dimension_numbers<[2], [2], [1], [1], [0, 0, 0, 1, 1, 1], [0], [0]>} : vector<1x8x8xbf16>, vector<1x8x8xbf16>, vector<1x8x8xf32> -> vector<1x8x8xf32>
    "tpu.trace_stop"() : () -> ()
    %102 = vector.shape_cast %100 : vector<8x8xf32> to vector<1x8x8xf32>
    %103 = arith.addf %101, %102 : vector<1x8x8xf32>
    %cst_38 = arith.constant dense<0xFF800000> : vector<1x8xf32>
    %104 = vector.multi_reduction <maximumf>, %103, %cst_38 [2] : vector<1x8x8xf32> to vector<1x8xf32>
    %105 = vector.shape_cast %104 : vector<1x8xf32> to vector<1x8x1xf32>
    %106 = vector.broadcast %105 : vector<1x8x1xf32> to vector<1x8x8xf32>
    %107 = arith.subf %103, %106 : vector<1x8x8xf32>
    %108 = math.exp %107 : vector<1x8x8xf32>
    %cst_39 = arith.constant dense<0.000000e+00> : vector<1x8xf32>
    %109 = vector.multi_reduction <add>, %108, %cst_39 [2] : vector<1x8x8xf32> to vector<1x8xf32>
    %110 = vector.shape_cast %109 : vector<1x8xf32> to vector<1x8x1xf32>
    %cst_40 = arith.constant 1.000000e+00 : f32
    %111 = vector.broadcast %cst_40 : f32 to vector<1x8x1xf32>
    %112 = arith.divf %111, %110 : vector<1x8x1xf32>
    %113 = vector.broadcast %112 : vector<1x8x1xf32> to vector<1x8x8xf32>
    %114 = arith.mulf %108, %113 : vector<1x8x8xf32>
    %115 = arith.truncf %114 : vector<1x8x8xf32> to vector<1x8x8xbf16>
    "tpu.trace_start"() <{level = 10 : i32, message = "bqk,bkd->bqd"}> : () -> ()
    %cst_41 = arith.constant dense<0.000000e+00> : vector<1x8x8xf32>
    %116 = tpu.matmul %115, %96, %cst_41 {dimension_numbers = #tpu.dot_dimension_numbers<[2], [1], [1], [2], [0, 0, 0, 1, 1, 2], [0], [0]>} : vector<1x8x8xbf16>, vector<1x8x8xbf16>, vector<1x8x8xf32> -> vector<1x8x8xf32>
    "tpu.trace_stop"() : () -> ()
    %117 = arith.truncf %116 : vector<1x8x8xf32> to vector<1x8x8xbf16>
    %118 = tpu.concatenate %48, %71, %94, %117 in 2 : vector<1x8x8xbf16>, vector<1x8x8xbf16>, vector<1x8x8xbf16>, vector<1x8x8xbf16> -> vector<1x8x32xbf16>
    %119 = vector.shape_cast %118 : vector<1x8x32xbf16> to vector<8x32xbf16>
    %c0_42 = arith.constant 0 : index
    %c0_43 = arith.constant 0 : index
    %120 = vector.load %arg7[%c0_42, %c0_43] : memref<32x32xbf16, #tpu.memory_space<vmem>>, vector<32x32xbf16>
    %cst_44 = arith.constant dense<0.000000e+00> : vector<8x32xf32>
    %121 = tpu.matmul %119, %120, %cst_44 {dimension_numbers = #tpu.dot_dimension_numbers<[1], [0], [0], [1], [0, 0, 1, 1], [], []>} : vector<8x32xbf16>, vector<32x32xbf16>, vector<8x32xf32> -> vector<8x32xf32>
    %c0_45 = arith.constant 0 : index
    %c0_46 = arith.constant 0 : index
    %122 = vector.load %arg8[%c0_45, %c0_46] : memref<1x32xf32, #tpu.memory_space<vmem>>, vector<1x32xf32>
    %123 = vector.broadcast %122 : vector<1x32xf32> to vector<8x32xf32>
    %124 = arith.addf %121, %123 : vector<8x32xf32>
    %125 = vector.shape_cast %124 : vector<8x32xf32> to vector<1x8x32xf32>
    %126 = arith.addf %0, %125 : vector<1x8x32xf32>
    %c0_47 = arith.constant 0 : index
    %c0_48 = arith.constant 0 : index
    %127 = vector.load %arg9[%c0_47, %c0_48] : memref<1x32xf32, #tpu.memory_space<vmem>>, vector<1x32xf32>
    %c0_49 = arith.constant 0 : index
    %c0_50 = arith.constant 0 : index
    %128 = vector.load %arg10[%c0_49, %c0_50] : memref<1x32xf32, #tpu.memory_space<vmem>>, vector<1x32xf32>
    %cst_51 = arith.constant dense<0.000000e+00> : vector<1x8xf32>
    %129 = vector.multi_reduction <add>, %126, %cst_51 [2] : vector<1x8x32xf32> to vector<1x8xf32>
    %130 = vector.shape_cast %129 : vector<1x8xf32> to vector<1x8x1xf32>
    %cst_52 = arith.constant 3.200000e+01 : f32
    %131 = vector.broadcast %cst_52 : f32 to vector<1x8x1xf32>
    %132 = arith.divf %130, %131 : vector<1x8x1xf32>
    %133 = vector.broadcast %132 : vector<1x8x1xf32> to vector<1x8x32xf32>
    %134 = arith.subf %126, %133 : vector<1x8x32xf32>
    %135 = arith.mulf %134, %134 : vector<1x8x32xf32>
    %cst_53 = arith.constant dense<0.000000e+00> : vector<1x8xf32>
    %136 = vector.multi_reduction <add>, %135, %cst_53 [2] : vector<1x8x32xf32> to vector<1x8xf32>
    %137 = vector.shape_cast %136 : vector<1x8xf32> to vector<1x8x1xf32>
    %cst_54 = arith.constant 3.200000e+01 : f32
    %138 = vector.broadcast %cst_54 : f32 to vector<1x8x1xf32>
    %139 = arith.divf %137, %138 : vector<1x8x1xf32>
    %140 = vector.broadcast %132 : vector<1x8x1xf32> to vector<1x8x32xf32>
    %141 = arith.subf %126, %140 : vector<1x8x32xf32>
    %cst_55 = arith.constant 9.99999974E-6 : f32
    %142 = vector.broadcast %cst_55 : f32 to vector<1x8x1xf32>
    %143 = arith.addf %139, %142 : vector<1x8x1xf32>
    %144 = math.rsqrt %143 : vector<1x8x1xf32>
    %145 = vector.broadcast %144 : vector<1x8x1xf32> to vector<1x8x32xf32>
    %146 = arith.mulf %141, %145 : vector<1x8x32xf32>
    %147 = vector.shape_cast %127 : vector<1x32xf32> to vector<1x1x32xf32>
    %148 = vector.broadcast %147 : vector<1x1x32xf32> to vector<1x8x32xf32>
    %149 = arith.mulf %146, %148 : vector<1x8x32xf32>
    %150 = vector.shape_cast %128 : vector<1x32xf32> to vector<1x1x32xf32>
    %151 = vector.broadcast %150 : vector<1x1x32xf32> to vector<1x8x32xf32>
    %152 = arith.addf %149, %151 : vector<1x8x32xf32>
    %153 = vector.shape_cast %152 : vector<1x8x32xf32> to vector<8x32xf32>
    %154 = arith.truncf %153 : vector<8x32xf32> to vector<8x32xbf16>
    %c0_56 = arith.constant 0 : index
    %c0_57 = arith.constant 0 : index
    %155 = vector.load %arg11[%c0_56, %c0_57] : memref<32x64xbf16, #tpu.memory_space<vmem>>, vector<32x64xbf16>
    %cst_58 = arith.constant dense<0.000000e+00> : vector<8x64xf32>
    %156 = tpu.matmul %154, %155, %cst_58 {dimension_numbers = #tpu.dot_dimension_numbers<[1], [0], [0], [1], [0, 0, 1, 1], [], []>} : vector<8x32xbf16>, vector<32x64xbf16>, vector<8x64xf32> -> vector<8x64xf32>
    %c0_59 = arith.constant 0 : index
    %c0_60 = arith.constant 0 : index
    %157 = vector.load %arg12[%c0_59, %c0_60] : memref<1x64xf32, #tpu.memory_space<vmem>>, vector<1x64xf32>
    %158 = vector.broadcast %157 : vector<1x64xf32> to vector<8x64xf32>
    %159 = arith.addf %156, %158 : vector<8x64xf32>
    %cst_61 = arith.constant 0.000000e+00 : f32
    %160 = vector.broadcast %cst_61 : f32 to vector<8x64xf32>
    %161 = arith.maximumf %159, %160 : vector<8x64xf32>
    %162 = arith.truncf %161 : vector<8x64xf32> to vector<8x64xbf16>
    %c0_62 = arith.constant 0 : index
    %c0_63 = arith.constant 0 : index
    %163 = vector.load %arg13[%c0_62, %c0_63] : memref<64x32xbf16, #tpu.memory_space<vmem>>, vector<64x32xbf16>
    %cst_64 = arith.constant dense<0.000000e+00> : vector<8x32xf32>
    %164 = tpu.matmul %162, %163, %cst_64 {dimension_numbers = #tpu.dot_dimension_numbers<[1], [0], [0], [1], [0, 0, 1, 1], [], []>} : vector<8x64xbf16>, vector<64x32xbf16>, vector<8x32xf32> -> vector<8x32xf32>
    %c0_65 = arith.constant 0 : index
    %c0_66 = arith.constant 0 : index
    %165 = vector.load %arg14[%c0_65, %c0_66] : memref<1x32xf32, #tpu.memory_space<vmem>>, vector<1x32xf32>
    %166 = vector.broadcast %165 : vector<1x32xf32> to vector<8x32xf32>
    %167 = arith.addf %164, %166 : vector<8x32xf32>
    %168 = vector.shape_cast %167 : vector<8x32xf32> to vector<1x8x32xf32>
    %169 = arith.addf %152, %168 : vector<1x8x32xf32>
    %c0_67 = arith.constant 0 : index
    %c0_68 = arith.constant 0 : index
    %170 = vector.load %arg15[%c0_67, %c0_68] : memref<1x32xf32, #tpu.memory_space<vmem>>, vector<1x32xf32>
    %c0_69 = arith.constant 0 : index
    %c0_70 = arith.constant 0 : index
    %171 = vector.load %arg16[%c0_69, %c0_70] : memref<1x32xf32, #tpu.memory_space<vmem>>, vector<1x32xf32>
    %cst_71 = arith.constant dense<0.000000e+00> : vector<1x8xf32>
    %172 = vector.multi_reduction <add>, %169, %cst_71 [2] : vector<1x8x32xf32> to vector<1x8xf32>
    %173 = vector.shape_cast %172 : vector<1x8xf32> to vector<1x8x1xf32>
    %cst_72 = arith.constant 3.200000e+01 : f32
    %174 = vector.broadcast %cst_72 : f32 to vector<1x8x1xf32>
    %175 = arith.divf %173, %174 : vector<1x8x1xf32>
    %176 = vector.broadcast %175 : vector<1x8x1xf32> to vector<1x8x32xf32>
    %177 = arith.subf %169, %176 : vector<1x8x32xf32>
    %178 = arith.mulf %177, %177 : vector<1x8x32xf32>
    %cst_73 = arith.constant dense<0.000000e+00> : vector<1x8xf32>
    %179 = vector.multi_reduction <add>, %178, %cst_73 [2] : vector<1x8x32xf32> to vector<1x8xf32>
    %180 = vector.shape_cast %179 : vector<1x8xf32> to vector<1x8x1xf32>
    %cst_74 = arith.constant 3.200000e+01 : f32
    %181 = vector.broadcast %cst_74 : f32 to vector<1x8x1xf32>
    %182 = arith.divf %180, %181 : vector<1x8x1xf32>
    %183 = vector.broadcast %175 : vector<1x8x1xf32> to vector<1x8x32xf32>
    %184 = arith.subf %169, %183 : vector<1x8x32xf32>
    %cst_75 = arith.constant 9.99999974E-6 : f32
    %185 = vector.broadcast %cst_75 : f32 to vector<1x8x1xf32>
    %186 = arith.addf %182, %185 : vector<1x8x1xf32>
    %187 = math.rsqrt %186 : vector<1x8x1xf32>
    %188 = vector.broadcast %187 : vector<1x8x1xf32> to vector<1x8x32xf32>
    %189 = arith.mulf %184, %188 : vector<1x8x32xf32>
    %190 = vector.shape_cast %170 : vector<1x32xf32> to vector<1x1x32xf32>
    %191 = vector.broadcast %190 : vector<1x1x32xf32> to vector<1x8x32xf32>
    %192 = arith.mulf %189, %191 : vector<1x8x32xf32>
    %193 = vector.shape_cast %171 : vector<1x32xf32> to vector<1x1x32xf32>
    %194 = vector.broadcast %193 : vector<1x1x32xf32> to vector<1x8x32xf32>
    %195 = arith.addf %192, %194 : vector<1x8x32xf32>
    %c0_76 = arith.constant 0 : index
    %c0_77 = arith.constant 0 : index
    %c0_78 = arith.constant 0 : index
    %196 = vector.load %arg17[%c0_76, %c0_77, %c0_78] : memref<1x8x32xf32, #tpu.memory_space<vmem>>, vector<1x8x32xf32>
    tpu.vector_store %arg17[%c0_76, %c0_77, %c0_78], %195 {strides = array<i32>} : memref<1x8x32xf32, #tpu.memory_space<vmem>>, vector<1x8x32xf32>,
    return
  }
  func.func @transform_0(%arg0: i32) -> (i32, i32, i32) {
    %c0_i32 = arith.constant 0 : i32
    %c0_i32_0 = arith.constant 0 : i32
    %c0_i32_1 = arith.constant 0 : i32
    return %arg0, %c0_i32, %c0_i32_0 : i32, i32, i32
  }
  func.func @transform_1(%arg0: i32) -> (i32, i32, i32) {
    %c0_i32 = arith.constant 0 : i32
    %c0_i32_0 = arith.constant 0 : i32
    %c0_i32_1 = arith.constant 0 : i32
    return %arg0, %c0_i32, %c0_i32_0 : i32, i32, i32
  }
  func.func @transform_2(%arg0: i32) -> (i32, i32) {
    %c0_i32 = arith.constant 0 : i32
    %c0_i32_0 = arith.constant 0 : i32
    %c0_i32_1 = arith.constant 0 : i32
    return %c0_i32, %c0_i32_0 : i32, i32
  }
  func.func @transform_3(%arg0: i32) -> (i32, i32) {
    %c0_i32 = arith.constant 0 : i32
    %c0_i32_0 = arith.constant 0 : i32
    %c0_i32_1 = arith.constant 0 : i32
    return %c0_i32, %c0_i32_0 : i32, i32
  }
  func.func @transform_4(%arg0: i32) -> (i32, i32) {
    %c0_i32 = arith.constant 0 : i32
    %c0_i32_0 = arith.constant 0 : i32
    %c0_i32_1 = arith.constant 0 : i32
    return %c0_i32, %c0_i32_0 : i32, i32
  }
  func.func @transform_5(%arg0: i32) -> (i32, i32) {
    %c0_i32 = arith.constant 0 : i32
    %c0_i32_0 = arith.constant 0 : i32
    %c0_i32_1 = arith.constant 0 : i32
    return %c0_i32, %c0_i32_0 : i32, i32
  }
  func.func @transform_6(%arg0: i32) -> (i32, i32) {
    %c0_i32 = arith.constant 0 : i32
    %c0_i32_0 = arith.constant 0 : i32
    %c0_i32_1 = arith.constant 0 : i32
    return %c0_i32, %c0_i32_0 : i32, i32
  }
  func.func @transform_7(%arg0: i32) -> (i32, i32) {
    %c0_i32 = arith.constant 0 : i32
    %c0_i32_0 = arith.constant 0 : i32
    %c0_i32_1 = arith.constant 0 : i32
    return %c0_i32, %c0_i32_0 : i32, i32
  }
  func.func @transform_8(%arg0: i32) -> (i32, i32) {
    %c0_i32 = arith.constant 0 : i32
    %c0_i32_0 = arith.constant 0 : i32
    %c0_i32_1 = arith.constant 0 : i32
    return %c0_i32, %c0_i32_0 : i32, i32
  }
  func.func @transform_9(%arg0: i32) -> (i32, i32) {
    %c0_i32 = arith.constant 0 : i32
    %c0_i32_0 = arith.constant 0 : i32
    %c0_i32_1 = arith.constant 0 : i32
    return %c0_i32, %c0_i32_0 : i32, i32
  }
  func.func @transform_10(%arg0: i32) -> (i32, i32) {
    %c0_i32 = arith.constant 0 : i32
    %c0_i32_0 = arith.constant 0 : i32
    %c0_i32_1 = arith.constant 0 : i32
    return %c0_i32, %c0_i32_0 : i32, i32
  }
  func.func @transform_11(%arg0: i32) -> (i32, i32) {
    %c0_i32 = arith.constant 0 : i32
    %c0_i32_0 = arith.constant 0 : i32
    %c0_i32_1 = arith.constant 0 : i32
    return %c0_i32, %c0_i32_0 : i32, i32
  }
  func.func @transform_12(%arg0: i32) -> (i32, i32) {
    %c0_i32 = arith.constant 0 : i32
    %c0_i32_0 = arith.constant 0 : i32
    %c0_i32_1 = arith.constant 0 : i32
    return %c0_i32, %c0_i32_0 : i32, i32
  }
  func.func @transform_13(%arg0: i32) -> (i32, i32) {
    %c0_i32 = arith.constant 0 : i32
    %c0_i32_0 = arith.constant 0 : i32
    %c0_i32_1 = arith.constant 0 : i32
    return %c0_i32, %c0_i32_0 : i32, i32
  }
  func.func @transform_14(%arg0: i32) -> (i32, i32) {
    %c0_i32 = arith.constant 0 : i32
    %c0_i32_0 = arith.constant 0 : i32
    %c0_i32_1 = arith.constant 0 : i32
    return %c0_i32, %c0_i32_0 : i32, i32
  }
  func.func @transform_15(%arg0: i32) -> (i32, i32) {
    %c0_i32 = arith.constant 0 : i32
    %c0_i32_0 = arith.constant 0 : i32
    %c0_i32_1 = arith.constant 0 : i32
    return %c0_i32, %c0_i32_0 : i32, i32
  }
  func.func @transform_16(%arg0: i32) -> (i32, i32, i32) {
    %c0_i32 = arith.constant 0 : i32
    %c0_i32_0 = arith.constant 0 : i32
    %c0_i32_1 = arith.constant 0 : i32
    return %arg0, %c0_i32, %c0_i32_0 : i32, i32, i32
  }
}

</mosaic_0001>

<llo_original>
// kernel: tpu_custom_call.1
$region0: #{tpu_custom_call.1}
  #allocation0 [shape = 'u32[]', space=smem, size = 0x4, offset = 0x4, fixed_abs, tag = 'smem constant byte address 0x4 - core index']
  #allocation1 [shape = 'u32[144,128]{1,0:T(1,128)}', space=vmem, size = 0x12000, scoped, tag = 'internal scratch']
  %s0 = inlined_call_operand.vmem [shape: f32[2,8,32], index: 0, kind: input, shape index: {}]
  %s1 = inlined_call_operand.vmem [shape: f32[2,8,32], index: 1, kind: input, shape index: {}]
  %s2 = inlined_call_operand.vmem [shape: bf16[32,32], index: 2, kind: input, shape index: {}]
  %s3 = inlined_call_operand.vmem [shape: f32[1,32], index: 3, kind: input, shape index: {}]
  %s4 = inlined_call_operand.hbm [shape: bf16[32,32], index: 4, kind: input, shape index: {}]
  %s5 = inlined_call_operand.vmem [shape: f32[1,32], index: 5, kind: input, shape index: {}]
  %s6 = inlined_call_operand.hbm [shape: bf16[32,32], index: 6, kind: input, shape index: {}]
  %s7 = inlined_call_operand.hbm [shape: f32[1,32], index: 7, kind: input, shape index: {}]
  %s8 = inlined_call_operand.hbm [shape: f32[1,32], index: 8, kind: input, shape index: {}]
  %s9 = inlined_call_operand.hbm [shape: f32[1,32], index: 9, kind: input, shape index: {}]
  %s10 = inlined_call_operand.vmem [shape: bf16[32,64], index: 10, kind: input, shape index: {}]
  %s11 = inlined_call_operand.vmem [shape: f32[1,64], index: 11, kind: input, shape index: {}]
  %s12 = inlined_call_operand.vmem [shape: bf16[64,32], index: 12, kind: input, shape index: {}]
  %s13 = inlined_call_operand.vmem [shape: f32[1,32], index: 13, kind: input, shape index: {}]
  %s14 = inlined_call_operand.vmem [shape: f32[1,32], index: 14, kind: input, shape index: {}]
  %s15 = inlined_call_operand.vmem [shape: f32[1,32], index: 15, kind: input, shape index: {}]
  %s16 = inlined_call_operand.hbm [shape: f32[2,8,32], index: 16, kind: output, shape index: {}]
  %s17 = sld [smem:[#allocation0]]
  $region117: #{tpu_custom_call.1} parent=0
    _
  %s19 = ssub.s32 1, %s17
  %s20 = scalar_select 0, %s19, %s17
  $region1: #{tpu_custom_call.1} parent=0
    #allocation2 [shape = 'u8[8192]{0}', space=vmem, size = 0x2000, scoped, tag = 'input window, operand 4, single buffered']
    #allocation3 [shape = 's32[2]{0}', space=sflag, size = 0x8, scoped, tag = 'scoped memory for tpu_custom_call.1']
    #allocation4 [shape = 's32[2]{0}', space=sflag, size = 0x8, scoped, tag = 'scoped memory for tpu_custom_call.1']
    #allocation5 [shape = 'u8[8192]{0}', space=vmem, size = 0x2000, scoped, tag = 'input window, operand 6, single buffered']
    #allocation6 [shape = 's32[1]{0}', space=sflag, size = 0x4, scoped, tag = 'scoped memory for tpu_custom_call.1']
    #allocation7 [shape = 'u8[512]{0}', space=vmem, size = 0x400, scoped, tag = 'input window, operand 7, single buffered']
    #allocation8 [shape = 'u8[512]{0}', space=vmem, size = 0x400, scoped, tag = 'input window, operand 8, single buffered']
    #allocation9 [shape = 's32[1]{0}', space=sflag, size = 0x4, scoped, tag = 'scoped memory for tpu_custom_call.1']
    #allocation10 [shape = 'u8[512]{0}', space=vmem, size = 0x400, scoped, tag = 'input window, operand 9, single buffered']
    #allocation11 [shape = 'u8[8192]{0}', space=vmem, size = 0x2000, scoped, tag = 'output window, operand 0']
    %21 = vsyncpa [#allocation3], 0
    %22 = vsyncpa [#allocation6], 0
    %23 = vsyncpa [#allocation9], 0
    %24 = vsyncpa [#allocation4], 0
    %s25 = scalar_lea.sflag [#allocation4], 1
    %26 = vsyncpa %s25, 0
    loop: start=0, step=1, limit=4
    $region2: #{tpu_custom_call.1} parent=1 // loop_pre_header
      _
    $region3: #{tpu_custom_call.1} parent=1 // loop_header
      %s28 = sphi 0, %s32
      %p29 = scmp.ge.s32.totalorder %s28, 4
      %s38 = sphi 0, %s40
      %s41 = sphi 0, %s38
      %s42 = sphi 0, %s41
      %s58 = sphi 0, %s42
      %s64 = sphi 0, %s66
      %s67 = sphi 0, %s64
      %s68 = sphi 0, %s67
      %s84 = sphi 0, %s68
      %s88 = sphi 0, %s88
      %s90 = sphi 0, %s88
      %s91 = sphi 0, %s90
      %s105 = sphi 0, %s91
      %s109 = sphi 0, %s109
      %s111 = sphi 0, %s109
      %s112 = sphi 0, %s111
      %s126 = sphi 0, %s112
      %s130 = sphi 0, %s130
      %s132 = sphi 0, %s130
      %s133 = sphi 0, %s132
      %s147 = sphi 0, %s133
      %s151 = sphi 0, %s151
      %s153 = sphi 0, %s151
      %s154 = sphi 0, %s153
      %s168 = sphi 0, %s154
      %s172 = sphi 0, %s172
      %s174 = sphi 0, %s172
      %s175 = sphi 0, %s174
      %s189 = sphi 0, %s175
      %s193 = sphi 0, %s193
      %s195 = sphi 0, %s193
      %s196 = sphi 0, %s195
      %s210 = sphi 0, %s196
      %s214 = sphi 0, %s214
      %s216 = sphi 0, %s214
      %s217 = sphi 0, %s216
      %s231 = sphi 0, %s217
      %s235 = sphi 0, %s235
      %s237 = sphi 0, %s235
      %s238 = sphi 0, %s237
      %s252 = sphi 0, %s238
      %s256 = sphi 0, %s256
      %s258 = sphi 0, %s256
      %s259 = sphi 0, %s258
      %s273 = sphi 0, %s259
      %s277 = sphi 0, %s277
      %s279 = sphi 0, %s277
      %s280 = sphi 0, %s279
      %s294 = sphi 0, %s280
      %s298 = sphi 0, %s298
      %s300 = sphi 0, %s298
      %s301 = sphi 0, %s300
      %s315 = sphi 0, %s301
      %s319 = sphi 0, %s319
      %s321 = sphi 0, %s319
      %s322 = sphi 0, %s321
      %s336 = sphi 0, %s322
      %s340 = sphi 0, %s340
      %s342 = sphi 0, %s340
      %s343 = sphi 0, %s342
      %s357 = sphi 0, %s343
      %s361 = sphi 0, %s361
      %s363 = sphi 0, %s361
      %s364 = sphi 0, %s363
      %s378 = sphi 0, %s364
      %s384 = sphi 0, %s386
      %s387 = sphi 0, %s384
      %s388 = sphi 0, %s387
      %s404 = sphi 0, %s388
    $region4: #{tpu_custom_call.1} parent=1 // loop_header_branch
      %31 = sbr.rel (%p29) target = $region8
    $region5: #{tpu_custom_call.1} parent=1 // loop_body
      %s33 = ssub.s32 %s28, 1
      %s34 = ssub.s32 %s28, 2
      %s35 = sadd.s32 %s28, 1
      %s36 = ssub.s32 %s28, %s35
      %p37 = scmp.eq.s32.totalorder %s36, 0
      %s39 = sadd.s32 %s38, 1
      %s40 = scalar_select %p37, %s38, %s39
      %p43 = pneg %p37
      %p44 = scmp.eq.s32.totalorder %s28, 1
      %p45 = por %p43, %p44
      %p46 = scmp.ne.s32.totalorder %s38, %s41
      %p47 = scmp.eq.s32.totalorder %s28, 0
      %p48 = por %p46, %p47
      %p49 = scmp.ne.s32.totalorder %s38, %s41
      %p50 = scmp.eq.s32.totalorder %s33, 1
      %p51 = por %p49, %p50
      %p52 = scmp.ne.s32.totalorder %s41, %s42
      %p53 = scmp.eq.s32.totalorder %s33, 0
      %p54 = por %p52, %p53
      %p55 = scmp.ne.s32.totalorder %s41, %s42
      %p56 = scmp.eq.s32.totalorder %s34, 1
      %p57 = por %p55, %p56
      %p59 = scmp.ne.s32.totalorder %s42, %s58
      %p60 = scmp.eq.s32.totalorder %s34, 0
      %p61 = por %p59, %p60
      %s62 = ssub.s32 %s28, %s35
      %p63 = scmp.eq.s32.totalorder %s62, 0
      %s65 = sadd.s32 %s64, 1
      %s66 = scalar_select %p63, %s64, %s65
      %p69 = pneg %p63
      %p70 = scmp.eq.s32.totalorder %s28, 1
      %p71 = por %p69, %p70
      %p72 = scmp.ne.s32.totalorder %s64, %s67
      %p73 = scmp.eq.s32.totalorder %s28, 0
      %p74 = por %p72, %p73
      %p75 = scmp.ne.s32.totalorder %s64, %s67
      %p76 = scmp.eq.s32.totalorder %s33, 1
      %p77 = por %p75, %p76
      %p78 = scmp.ne.s32.totalorder %s67, %s68
      %p79 = scmp.eq.s32.totalorder %s33, 0
      %p80 = por %p78, %p79
      %p81 = scmp.ne.s32.totalorder %s67, %s68
      %p82 = scmp.eq.s32.totalorder %s34, 1
      %p83 = por %p81, %p82
      %p85 = scmp.ne.s32.totalorder %s68, %s84
      %p86 = scmp.eq.s32.totalorder %s34, 0
      %p87 = por %p85, %p86
      %s89 = sadd.s32 %s88, 1
      %p92 = scmp.eq.s32.totalorder %s28, 1
      %p93 = scmp.ne.s32.totalorder %s88, %s90
      %p94 = scmp.eq.s32.totalorder %s28, 0
      %p95 = por %p93, %p94
      %p96 = scmp.ne.s32.totalorder %s88, %s90
      %p97 = scmp.eq.s32.totalorder %s33, 1
      %p98 = por %p96, %p97
      %p99 = scmp.ne.s32.totalorder %s90, %s91
      %p100 = scmp.eq.s32.totalorder %s33, 0
      %p101 = por %p99, %p100
      %p102 = scmp.ne.s32.totalorder %s90, %s91
      %p103 = scmp.eq.s32.totalorder %s34, 1
      %p104 = por %p102, %p103
      %p106 = scmp.ne.s32.totalorder %s91, %s105
      %p107 = scmp.eq.s32.totalorder %s34, 0
      %p108 = por %p106, %p107
      %s110 = sadd.s32 %s109, 1
      %p113 = scmp.eq.s32.totalorder %s28, 1
      %p114 = scmp.ne.s32.totalorder %s109, %s111
      %p115 = scmp.eq.s32.totalorder %s28, 0
      %p116 = por %p114, %p115
      %p117 = scmp.ne.s32.totalorder %s109, %s111
      %p118 = scmp.eq.s32.totalorder %s33, 1
      %p119 = por %p117, %p118
      %p120 = scmp.ne.s32.totalorder %s111, %s112
      %p121 = scmp.eq.s32.totalorder %s33, 0
      %p122 = por %p120, %p121
      %p123 = scmp.ne.s32.totalorder %s111, %s112
      %p124 = scmp.eq.s32.totalorder %s34, 1
      %p125 = por %p123, %p124
      %p127 = scmp.ne.s32.totalorder %s112, %s126
      %p128 = scmp.eq.s32.totalorder %s34, 0
      %p129 = por %p127, %p128
      %s131 = sadd.s32 %s130, 1
      %p134 = scmp.eq.s32.totalorder %s28, 1
      %p135 = scmp.ne.s32.totalorder %s130, %s132
      %p136 = scmp.eq.s32.totalorder %s28, 0
      %p137 = por %p135, %p136
      %p138 = scmp.ne.s32.totalorder %s130, %s132
      %p139 = scmp.eq.s32.totalorder %s33, 1
      %p140 = por %p138, %p139
      %p141 = scmp.ne.s32.totalorder %s132, %s133
      %p142 = scmp.eq.s32.totalorder %s33, 0
      %p143 = por %p141, %p142
      %p144 = scmp.ne.s32.totalorder %s132, %s133
      %p145 = scmp.eq.s32.totalorder %s34, 1
      %p146 = por %p144, %p145
      %p148 = scmp.ne.s32.totalorder %s133, %s147
      %p149 = scmp.eq.s32.totalorder %s34, 0
      %p150 = por %p148, %p149
      %s152 = sadd.s32 %s151, 1
      %p155 = scmp.eq.s32.totalorder %s28, 1
      %p156 = scmp.ne.s32.totalorder %s151, %s153
      %p157 = scmp.eq.s32.totalorder %s28, 0
      %p158 = por %p156, %p157
      %p159 = scmp.ne.s32.totalorder %s151, %s153
      %p160 = scmp.eq.s32.totalorder %s33, 1
      %p161 = por %p159, %p160
      %p162 = scmp.ne.s32.totalorder %s153, %s154
      %p163 = scmp.eq.s32.totalorder %s33, 0
      %p164 = por %p162, %p163
      %p165 = scmp.ne.s32.totalorder %s153, %s154
      %p166 = scmp.eq.s32.totalorder %s34, 1
      %p167 = por %p165, %p166
      %p169 = scmp.ne.s32.totalorder %s154, %s168
      %p170 = scmp.eq.s32.totalorder %s34, 0
      %p171 = por %p169, %p170
      %s173 = sadd.s32 %s172, 1
      %p176 = scmp.eq.s32.totalorder %s28, 1
      %p177 = scmp.ne.s32.totalorder %s172, %s174
      %p178 = scmp.eq.s32.totalorder %s28, 0
      %p179 = por %p177, %p178
      %p180 = scmp.ne.s32.totalorder %s172, %s174
      %p181 = scmp.eq.s32.totalorder %s33, 1
      %p182 = por %p180, %p181
      %p183 = scmp.ne.s32.totalorder %s174, %s175
      %p184 = scmp.eq.s32.totalorder %s33, 0
      %p185 = por %p183, %p184
      %p186 = scmp.ne.s32.totalorder %s174, %s175
      %p187 = scmp.eq.s32.totalorder %s34, 1
      %p188 = por %p186, %p187
      %p190 = scmp.ne.s32.totalorder %s175, %s189
      %p191 = scmp.eq.s32.totalorder %s34, 0
      %p192 = por %p190, %p191
      %s194 = sadd.s32 %s193, 1
      %p197 = scmp.eq.s32.totalorder %s28, 1
      %p198 = scmp.ne.s32.totalorder %s193, %s195
      %p199 = scmp.eq.s32.totalorder %s28, 0
      %p200 = por %p198, %p199
      %p201 = scmp.ne.s32.totalorder %s193, %s195
      %p202 = scmp.eq.s32.totalorder %s33, 1
      %p203 = por %p201, %p202
      %p204 = scmp.ne.s32.totalorder %s195, %s196
      %p205 = scmp.eq.s32.totalorder %s33, 0
      %p206 = por %p204, %p205
      %p207 = scmp.ne.s32.totalorder %s195, %s196
      %p208 = scmp.eq.s32.totalorder %s34, 1
      %p209 = por %p207, %p208
      %p211 = scmp.ne.s32.totalorder %s196, %s210
      %p212 = scmp.eq.s32.totalorder %s34, 0
      %p213 = por %p211, %p212
      %s215 = sadd.s32 %s214, 1
      %p218 = scmp.eq.s32.totalorder %s28, 1
      %p219 = scmp.ne.s32.totalorder %s214, %s216
      %p220 = scmp.eq.s32.totalorder %s28, 0
      %p221 = por %p219, %p220
      %p222 = scmp.ne.s32.totalorder %s214, %s216
      %p223 = scmp.eq.s32.totalorder %s33, 1
      %p224 = por %p222, %p223
      %p225 = scmp.ne.s32.totalorder %s216, %s217
      %p226 = scmp.eq.s32.totalorder %s33, 0
      %p227 = por %p225, %p226
      %p228 = scmp.ne.s32.totalorder %s216, %s217
      %p229 = scmp.eq.s32.totalorder %s34, 1
      %p230 = por %p228, %p229
      %p232 = scmp.ne.s32.totalorder %s217, %s231
      %p233 = scmp.eq.s32.totalorder %s34, 0
      %p234 = por %p232, %p233
      %s236 = sadd.s32 %s235, 1
      %p239 = scmp.eq.s32.totalorder %s28, 1
      %p240 = scmp.ne.s32.totalorder %s235, %s237
      %p241 = scmp.eq.s32.totalorder %s28, 0
      %p242 = por %p240, %p241
      %p243 = scmp.ne.s32.totalorder %s235, %s237
      %p244 = scmp.eq.s32.totalorder %s33, 1
      %p245 = por %p243, %p244
      %p246 = scmp.ne.s32.totalorder %s237, %s238
      %p247 = scmp.eq.s32.totalorder %s33, 0
      %p248 = por %p246, %p247
      %p249 = scmp.ne.s32.totalorder %s237, %s238
      %p250 = scmp.eq.s32.totalorder %s34, 1
      %p251 = por %p249, %p250
      %p253 = scmp.ne.s32.totalorder %s238, %s252
      %p254 = scmp.eq.s32.totalorder %s34, 0
      %p255 = por %p253, %p254
      %s257 = sadd.s32 %s256, 1
      %p260 = scmp.eq.s32.totalorder %s28, 1
      %p261 = scmp.ne.s32.totalorder %s256, %s258
      %p262 = scmp.eq.s32.totalorder %s28, 0
      %p263 = por %p261, %p262
      %p264 = scmp.ne.s32.totalorder %s256, %s258
      %p265 = scmp.eq.s32.totalorder %s33, 1
      %p266 = por %p264, %p265
      %p267 = scmp.ne.s32.totalorder %s258, %s259
      %p268 = scmp.eq.s32.totalorder %s33, 0
      %p269 = por %p267, %p268
      %p270 = scmp.ne.s32.totalorder %s258, %s259
      %p271 = scmp.eq.s32.totalorder %s34, 1
      %p272 = por %p270, %p271
      %p274 = scmp.ne.s32.totalorder %s259, %s273
      %p275 = scmp.eq.s32.totalorder %s34, 0
      %p276 = por %p274, %p275
      %s278 = sadd.s32 %s277, 1
      %p281 = scmp.eq.s32.totalorder %s28, 1
      %p282 = scmp.ne.s32.totalorder %s277, %s279
      %p283 = scmp.eq.s32.totalorder %s28, 0
      %p284 = por %p282, %p283
      %p285 = scmp.ne.s32.totalorder %s277, %s279
      %p286 = scmp.eq.s32.totalorder %s33, 1
      %p287 = por %p285, %p286
      %p288 = scmp.ne.s32.totalorder %s279, %s280
      %p289 = scmp.eq.s32.totalorder %s33, 0
      %p290 = por %p288, %p289
      %p291 = scmp.ne.s32.totalorder %s279, %s280
      %p292 = scmp.eq.s32.totalorder %s34, 1
      %p293 = por %p291, %p292
      %p295 = scmp.ne.s32.totalorder %s280, %s294
      %p296 = scmp.eq.s32.totalorder %s34, 0
      %p297 = por %p295, %p296
      %s299 = sadd.s32 %s298, 1
      %p302 = scmp.eq.s32.totalorder %s28, 1
      %p303 = scmp.ne.s32.totalorder %s298, %s300
      %p304 = scmp.eq.s32.totalorder %s28, 0
      %p305 = por %p303, %p304
      %p306 = scmp.ne.s32.totalorder %s298, %s300
      %p307 = scmp.eq.s32.totalorder %s33, 1
      %p308 = por %p306, %p307
      %p309 = scmp.ne.s32.totalorder %s300, %s301
      %p310 = scmp.eq.s32.totalorder %s33, 0
      %p311 = por %p309, %p310
      %p312 = scmp.ne.s32.totalorder %s300, %s301
      %p313 = scmp.eq.s32.totalorder %s34, 1
      %p314 = por %p312, %p313
      %p316 = scmp.ne.s32.totalorder %s301, %s315
      %p317 = scmp.eq.s32.totalorder %s34, 0
      %p318 = por %p316, %p317
      %s320 = sadd.s32 %s319, 1
      %p323 = scmp.eq.s32.totalorder %s28, 1
      %p324 = scmp.ne.s32.totalorder %s319, %s321
      %p325 = scmp.eq.s32.totalorder %s28, 0
      %p326 = por %p324, %p325
      %p327 = scmp.ne.s32.totalorder %s319, %s321
      %p328 = scmp.eq.s32.totalorder %s33, 1
      %p329 = por %p327, %p328
      %p330 = scmp.ne.s32.totalorder %s321, %s322
      %p331 = scmp.eq.s32.totalorder %s33, 0
      %p332 = por %p330, %p331
      %p333 = scmp.ne.s32.totalorder %s321, %s322
      %p334 = scmp.eq.s32.totalorder %s34, 1
      %p335 = por %p333, %p334
      %p337 = scmp.ne.s32.totalorder %s322, %s336
      %p338 = scmp.eq.s32.totalorder %s34, 0
      %p339 = por %p337, %p338
      %s341 = sadd.s32 %s340, 1
      %p344 = scmp.eq.s32.totalorder %s28, 1
      %p345 = scmp.ne.s32.totalorder %s340, %s342
      %p346 = scmp.eq.s32.totalorder %s28, 0
      %p347 = por %p345, %p346
      %p348 = scmp.ne.s32.totalorder %s340, %s342
      %p349 = scmp.eq.s32.totalorder %s33, 1
      %p350 = por %p348, %p349
      %p351 = scmp.ne.s32.totalorder %s342, %s343
      %p352 = scmp.eq.s32.totalorder %s33, 0
      %p353 = por %p351, %p352
      %p354 = scmp.ne.s32.totalorder %s342, %s343
      %p355 = scmp.eq.s32.totalorder %s34, 1
      %p356 = por %p354, %p355
      %p358 = scmp.ne.s32.totalorder %s343, %s357
      %p359 = scmp.eq.s32.totalorder %s34, 0
      %p360 = por %p358, %p359
      %s362 = sadd.s32 %s361, 1
      %p365 = scmp.eq.s32.totalorder %s28, 1
      %p366 = scmp.ne.s32.totalorder %s361, %s363
      %p367 = scmp.eq.s32.totalorder %s28, 0
      %p368 = por %p366, %p367
      %p369 = scmp.ne.s32.totalorder %s361, %s363
      %p370 = scmp.eq.s32.totalorder %s33, 1
      %p371 = por %p369, %p370
      %p372 = scmp.ne.s32.totalorder %s363, %s364
      %p373 = scmp.eq.s32.totalorder %s33, 0
      %p374 = por %p372, %p373
      %p375 = scmp.ne.s32.totalorder %s363, %s364
      %p376 = scmp.eq.s32.totalorder %s34, 1
      %p377 = por %p375, %p376
      %p379 = scmp.ne.s32.totalorder %s364, %s378
      %p380 = scmp.eq.s32.totalorder %s34, 0
      %p381 = por %p379, %p380
      %s382 = ssub.s32 %s28, %s35
      %p383 = scmp.eq.s32.totalorder %s382, 0
      %s385 = sadd.s32 %s384, 1
      %s386 = scalar_select %p383, %s384, %s385
      %p389 = pneg %p383
      %p390 = scmp.eq.s32.totalorder %s28, 1
      %p391 = por %p389, %p390
      %p392 = scmp.ne.s32.totalorder %s384, %s387
      %p393 = scmp.eq.s32.totalorder %s28, 0
      %p394 = por %p392, %p393
      %p395 = scmp.ne.s32.totalorder %s384, %s387
      %p396 = scmp.eq.s32.totalorder %s33, 1
      %p397 = por %p395, %p396
      %p398 = scmp.ne.s32.totalorder %s387, %s388
      %p399 = scmp.eq.s32.totalorder %s33, 0
      %p400 = por %p398, %p399
      %p401 = scmp.ne.s32.totalorder %s387, %s388
      %p402 = scmp.eq.s32.totalorder %s34, 1
      %p403 = por %p401, %p402
      %p405 = scmp.ne.s32.totalorder %s388, %s404
      %p406 = scmp.eq.s32.totalorder %s34, 0
      %p407 = por %p405, %p406
      %p408 = scmp.le.s32.totalorder 1, %s28
      %p409 = scmp.lt.s32.totalorder %s28, 3
      %p410 = pnand %p408, %p409
      %p411 = pneg %p410
      // Predicated region
      $region9: #{tpu_custom_call.1} parent=5 // pred_check
        _
      $region10: #{tpu_custom_call.1} parent=5 // pred_check_branch
        %413 = sbr.rel (%p410) target = $region12
      $region11: #{tpu_custom_call.1} parent=5 // pred_region
        %s414 = ssub.s32 %s28, 1
        // Predicated region
        $region13: #{tpu_custom_call.1} parent=11 // pred_check
          %p415 = pneg %p101
        $region14: #{tpu_custom_call.1} parent=11 // pred_check_branch
          %417 = sbr.rel (%p415) target = $region16
        $region15: #{tpu_custom_call.1} parent=11 // pred_region
          _
        $region16: #{tpu_custom_call.1} parent=11 // pred_fallthru
          _
        // Predicated region
        $region17: #{tpu_custom_call.1} parent=11 // pred_check
          %p418 = pneg %p122
        $region18: #{tpu_custom_call.1} parent=11 // pred_check_branch
          %420 = sbr.rel (%p418) target = $region20
        $region19: #{tpu_custom_call.1} parent=11 // pred_region
          _
        $region20: #{tpu_custom_call.1} parent=11 // pred_fallthru
          _
        // Predicated region
        $region21: #{tpu_custom_call.1} parent=11 // pred_check
          %p421 = pneg %p143
        $region22: #{tpu_custom_call.1} parent=11 // pred_check_branch
          %423 = sbr.rel (%p421) target = $region24
        $region23: #{tpu_custom_call.1} parent=11 // pred_region
          %s425 = ssub.s32 256, 256
          %426 = vsyncadd [#allocation3], %s425
          %s427 = sshll.u32 [#allocation2], 4
          %s428 = int_to_ptr.vmem [resolvable:$true] %s427
          %433 = dma.hbm_to_vmem [thread:$0]  %s4, 256, %s428, [#allocation3], 64, 64, 4
        $region24: #{tpu_custom_call.1} parent=11 // pred_fallthru
          _
        // Predicated region
        $region25: #{tpu_custom_call.1} parent=11 // pred_check
          %p434 = pneg %p164
        $region26: #{tpu_custom_call.1} parent=11 // pred_check_branch
          %436 = sbr.rel (%p434) target = $region28
        $region27: #{tpu_custom_call.1} parent=11 // pred_region
          _
        $region28: #{tpu_custom_call.1} parent=11 // pred_fallthru
          _
        // Predicated region
        $region29: #{tpu_custom_call.1} parent=11 // pred_check
          %p437 = pneg %p185
        $region30: #{tpu_custom_call.1} parent=11 // pred_check_branch
          %439 = sbr.rel (%p437) target = $region32
        $region31: #{tpu_custom_call.1} parent=11 // pred_region
          %s441 = ssub.s32 256, 256
          %442 = vsyncadd [#allocation6], %s441
          %s443 = sshll.u32 [#allocation5], 4
          %s444 = int_to_ptr.vmem [resolvable:$true] %s443
          %449 = dma.hbm_to_vmem [thread:$0]  %s6, 256, %s444, [#allocation6], 64, 64, 4
        $region32: #{tpu_custom_call.1} parent=11 // pred_fallthru
          _
        // Predicated region
        $region33: #{tpu_custom_call.1} parent=11 // pred_check
          %p450 = pneg %p206
        $region34: #{tpu_custom_call.1} parent=11 // pred_check_branch
          %452 = sbr.rel (%p450) target = $region36
        $region35: #{tpu_custom_call.1} parent=11 // pred_region
          %s454 = ssub.s32 16, 16
          %455 = vsyncadd [#allocation6], %s454
          %s457 = sshll.u32 [#allocation7], 4
          %s458 = int_to_ptr.vmem [resolvable:$true] %s457
          %460 = dma.hbm_to_vmem [thread:$0]  %s7, 16, %s458, [#allocation6]
        $region36: #{tpu_custom_call.1} parent=11 // pred_fallthru
          _
        // Predicated region
        $region37: #{tpu_custom_call.1} parent=11 // pred_check
          %p461 = pneg %p227
        $region38: #{tpu_custom_call.1} parent=11 // pred_check_branch
          %463 = sbr.rel (%p461) target = $region40
        $region39: #{tpu_custom_call.1} parent=11 // pred_region
          %s465 = ssub.s32 16, 16
          %466 = vsyncadd [#allocation9], %s465
          %s468 = sshll.u32 [#allocation8], 4
          %s469 = int_to_ptr.vmem [resolvable:$true] %s468
          %471 = dma.hbm_to_vmem [thread:$0]  %s8, 16, %s469, [#allocation9]
        $region40: #{tpu_custom_call.1} parent=11 // pred_fallthru
          _
        // Predicated region
        $region41: #{tpu_custom_call.1} parent=11 // pred_check
          %p472 = pneg %p248
        $region42: #{tpu_custom_call.1} parent=11 // pred_check_branch
          %474 = sbr.rel (%p472) target = $region44
        $region43: #{tpu_custom_call.1} parent=11 // pred_region
          %s476 = ssub.s32 16, 16
          %477 = vsyncadd [#allocation9], %s476
          %s479 = sshll.u32 [#allocation10], 4
          %s480 = int_to_ptr.vmem [resolvable:$true] %s479
          %482 = dma.hbm_to_vmem [thread:$0]  %s9, 16, %s480, [#allocation9]
        $region44: #{tpu_custom_call.1} parent=11 // pred_fallthru
          _
        // Predicated region
        $region45: #{tpu_custom_call.1} parent=11 // pred_check
          %p483 = pneg %p269
        $region46: #{tpu_custom_call.1} parent=11 // pred_check_branch
          %485 = sbr.rel (%p483) target = $region48
        $region47: #{tpu_custom_call.1} parent=11 // pred_region
          _
        $region48: #{tpu_custom_call.1} parent=11 // pred_fallthru
          _
        // Predicated region
        $region49: #{tpu_custom_call.1} parent=11 // pred_check
          %p486 = pneg %p290
        $region50: #{tpu_custom_call.1} parent=11 // pred_check_branch
          %488 = sbr.rel (%p486) target = $region52
        $region51: #{tpu_custom_call.1} parent=11 // pred_region
          _
        $region52: #{tpu_custom_call.1} parent=11 // pred_fallthru
          _
        // Predicated region
        $region53: #{tpu_custom_call.1} parent=11 // pred_check
          %p489 = pneg %p311
        $region54: #{tpu_custom_call.1} parent=11 // pred_check_branch
          %491 = sbr.rel (%p489) target = $region56
        $region55: #{tpu_custom_call.1} parent=11 // pred_region
          _
        $region56: #{tpu_custom_call.1} parent=11 // pred_fallthru
          _
        // Predicated region
        $region57: #{tpu_custom_call.1} parent=11 // pred_check
          %p492 = pneg %p332
        $region58: #{tpu_custom_call.1} parent=11 // pred_check_branch
          %494 = sbr.rel (%p492) target = $region60
        $region59: #{tpu_custom_call.1} parent=11 // pred_region
          _
        $region60: #{tpu_custom_call.1} parent=11 // pred_fallthru
          _
        // Predicated region
        $region61: #{tpu_custom_call.1} parent=11 // pred_check
          %p495 = pneg %p353
        $region62: #{tpu_custom_call.1} parent=11 // pred_check_branch
          %497 = sbr.rel (%p495) target = $region64
        $region63: #{tpu_custom_call.1} parent=11 // pred_region
          _
        $region64: #{tpu_custom_call.1} parent=11 // pred_fallthru
          _
        // Predicated region
        $region65: #{tpu_custom_call.1} parent=11 // pred_check
          %p498 = pneg %p374
        $region66: #{tpu_custom_call.1} parent=11 // pred_check_branch
          %500 = sbr.rel (%p498) target = $region68
        $region67: #{tpu_custom_call.1} parent=11 // pred_region
          _
        $region68: #{tpu_custom_call.1} parent=11 // pred_fallthru
          _
      $region12: #{tpu_custom_call.1} parent=5 // pred_fallthru
        _
      %p501 = scmp.lt.s32.totalorder %s28, 2
      // Predicated region
      $region69: #{tpu_custom_call.1} parent=5 // pred_check
        %p502 = pneg %p501
      $region70: #{tpu_custom_call.1} parent=5 // pred_check_branch
        %504 = sbr.rel (%p502) target = $region72
      $region71: #{tpu_custom_call.1} parent=5 // pred_region
        // Predicated region
        $region73: #{tpu_custom_call.1} parent=71 // pred_check
          %p505 = pneg %p48
        $region74: #{tpu_custom_call.1} parent=71 // pred_check_branch
          %507 = sbr.rel (%p505) target = $region76
        $region75: #{tpu_custom_call.1} parent=71 // pred_region
          %p508 = scmp.lt.s32.totalorder %s28, 1
          %s509 = scalar_select %p508, %s28, 1
          %s510 = smul.addr %s509, 8
          %s511 = scalar_lea.vmem %s0, %s510
        $region76: #{tpu_custom_call.1} parent=71 // pred_fallthru
          _
        // Predicated region
        $region77: #{tpu_custom_call.1} parent=71 // pred_check
          %p512 = pneg %p74
        $region78: #{tpu_custom_call.1} parent=71 // pred_check_branch
          %514 = sbr.rel (%p512) target = $region80
        $region79: #{tpu_custom_call.1} parent=71 // pred_region
          %p515 = scmp.lt.s32.totalorder %s28, 1
          %s516 = scalar_select %p515, %s28, 1
          %s517 = smul.addr %s516, 8
          %s518 = scalar_lea.vmem %s1, %s517
        $region80: #{tpu_custom_call.1} parent=71 // pred_fallthru
          _
      $region72: #{tpu_custom_call.1} parent=5 // pred_fallthru
        _
      %p519 = scmp.le.s32.totalorder 1, %s28
      %p520 = scmp.lt.s32.totalorder %s28, 3
      %p521 = pnand %p519, %p520
      %p522 = pneg %p521
      // Predicated region
      $region81: #{tpu_custom_call.1} parent=5 // pred_check
        _
      $region82: #{tpu_custom_call.1} parent=5 // pred_check_branch
        %524 = sbr.rel (%p521) target = $region84
      $region83: #{tpu_custom_call.1} parent=5 // pred_region
        %s525 = ssub.s32 %s28, 1
        // Predicated region
        $region85: #{tpu_custom_call.1} parent=83 // pred_check
          %p526 = pneg %p143
        $region86: #{tpu_custom_call.1} parent=83 // pred_check_branch
          %528 = sbr.rel (%p526) target = $region88
        $region87: #{tpu_custom_call.1} parent=83 // pred_region
          %529 = dma.done [#allocation3], 256
        $region88: #{tpu_custom_call.1} parent=83 // pred_fallthru
          _
        // Predicated region
        $region89: #{tpu_custom_call.1} parent=83 // pred_check
          %p530 = pneg %p185
        $region90: #{tpu_custom_call.1} parent=83 // pred_check_branch
          %532 = sbr.rel (%p530) target = $region92
        $region91: #{tpu_custom_call.1} parent=83 // pred_region
          %533 = dma.done [#allocation6], 256
        $region92: #{tpu_custom_call.1} parent=83 // pred_fallthru
          _
        // Predicated region
        $region93: #{tpu_custom_call.1} parent=83 // pred_check
          %p534 = pneg %p206
        $region94: #{tpu_custom_call.1} parent=83 // pred_check_branch
          %536 = sbr.rel (%p534) target = $region96
        $region95: #{tpu_custom_call.1} parent=83 // pred_region
          %537 = dma.done [#allocation6], 16
        $region96: #{tpu_custom_call.1} parent=83 // pred_fallthru
          _
        // Predicated region
        $region97: #{tpu_custom_call.1} parent=83 // pred_check
          %p538 = pneg %p227
        $region98: #{tpu_custom_call.1} parent=83 // pred_check_branch
          %540 = sbr.rel (%p538) target = $region100
        $region99: #{tpu_custom_call.1} parent=83 // pred_region
          %541 = dma.done [#allocation9], 16
        $region100: #{tpu_custom_call.1} parent=83 // pred_fallthru
          _
        // Predicated region
        $region101: #{tpu_custom_call.1} parent=83 // pred_check
          %p542 = pneg %p248
        $region102: #{tpu_custom_call.1} parent=83 // pred_check_branch
          %544 = sbr.rel (%p542) target = $region104
        $region103: #{tpu_custom_call.1} parent=83 // pred_region
          %545 = dma.done [#allocation9], 16
        $region104: #{tpu_custom_call.1} parent=83 // pred_fallthru
          _
        %p546 = scmp.lt.s32.totalorder %s33, 1
        %s547 = scalar_select %p546, %s33, 1
        %s548 = smul.addr %s547, 8
        %s549 = scalar_lea.vmem %s0, %s548
        %p550 = pneg %p54
        %p551 = pneg %p51
        %p552 = scmp.lt.s32.totalorder %s33, 1
        %s553 = scalar_select %p552, %s33, 1
        %s554 = smul.addr %s553, 8
        %s555 = scalar_lea.vmem %s1, %s554
        %p556 = pneg %p80
        %p557 = pneg %p77
        %p558 = pneg %p101
        %p559 = pneg %p98
        %p560 = pneg %p122
        %p561 = pneg %p119
        %p562 = pneg %p143
        %p563 = pneg %p140
        %p564 = pneg %p164
        %p565 = pneg %p161
        %p566 = pneg %p185
        %p567 = pneg %p182
        %p568 = pneg %p206
        %p569 = pneg %p203
        %p570 = pneg %p227
        %p571 = pneg %p224
        %p572 = pneg %p248
        %p573 = pneg %p245
        %p574 = pneg %p269
        %p575 = pneg %p266
        %p576 = pneg %p290
        %p577 = pneg %p287
        %p578 = pneg %p311
        %p579 = pneg %p308
        %p580 = pneg %p332
        %p581 = pneg %p329
        %p582 = pneg %p353
        %p583 = pneg %p350
        %p584 = pneg %p374
        %p585 = pneg %p371
        %p586 = pneg %p400
        %p587 = pneg %p397
        %s588 = sand.u32 %s387, 1
        %s589 = scalar_lea.sflag [#allocation4], %s588
        %s590 = sand.u32 %s387, 1
        %s591 = smul.addr %s590, 8
        %s592 = scalar_lea.vmem [#allocation11], %s591
        %p593 = scmp.lt.s32.totalorder %s33, 1
        %s594 = scalar_select %p593, %s33, 1
        %s595 = smul.addr %s594, 8
        %s596 = scalar_lea.vmem %s0, %s595
        %p597 = scmp.lt.s32.totalorder %s33, 1
        %s598 = scalar_select %p597, %s33, 1
        %s599 = smul.addr %s598, 8
        %s600 = scalar_lea.vmem %s1, %s599
        %v602 = vld [vmem:[%s596] sm:$0xff]
        %v603 = vld [vmem:[%s600] sm:$0xff]
        %v604 = vpack.c.bf16 %v602, %v602
        %v605 = vpack.c.bf16 %v603, %v603
        %v606 = vld [vmem:[%s2] sm:$0xf]
        %v607 = vld [vmem:[%s2 + $0x4] sm:$0xf]
        %v608 = vld [vmem:[%s2 + $0x8] sm:$0xf]
        %v609 = vld [vmem:[%s2 + $0xc] sm:$0xf]
        %v610 = vld [vmem:[%s3] sm:$0x1]
        %v612 = vlaneseq
        %v613 = vshrl.u32 %v612, 7
        %v614 = vsub.s32 0, %v613
        %v615 = vrot.slane %v610, %v614
        %v621 = vunpack.c.l.b16 %v606
        %v622 = vunpack.c.l.b16 %v607
        %v623 = vunpack.c.l.b16 %v608
        %v624 = vunpack.c.l.b16 %v609
        %v625 = vpack.c.b16 %v622, %v621
        %v626 = vpack.c.b16 %v624, %v623
        %vm629 = vcmask 261120
        %v631 = vsel %vm629, %v604, 0
        %633 = vmatprep.subr.bf16.mxu0 0
        %634 = vmatpush1.bf16.msra.mxu0 %v625
        %635 = vmatprep.subr.bf16.mxu0 0
        %636 = vmatpush1.bf16.msra.mxu0 %v626
        %637 = vmatprep.subr.bf16.mxu0 0
        %638 = vmatpush1.bf16.msra.mxu0 0
        %639 = vmatprep.subr.bf16.mxu0 0
        %640 = vmatpush1.bf16.msra.mxu0 0
        %641 = vmatprep.subr.bf16.mxu0 0
        %642 = vmatpush1.bf16.msra.mxu0 0
        %643 = vmatprep.subr.bf16.mxu0 0
        %644 = vmatpush1.bf16.msra.mxu0 0
        %645 = vmatprep.subr.bf16.mxu0 0
        %646 = vmatpush1.bf16.msra.mxu0 0
        %647 = vmatprep.subr.bf16.mxu0 0
        %648 = vmatpush1.bf16.msra.mxu0 0
        %649 = vmatprep.subr.bf16.mxu0 0
        %650 = vmatpush1.bf16.msra.mxu0 0
        %651 = vmatprep.subr.bf16.mxu0 0
        %652 = vmatpush1.bf16.msra.mxu0 0
        %653 = vmatprep.subr.bf16.mxu0 0
        %654 = vmatpush1.bf16.msra.mxu0 0
        %655 = vmatprep.subr.bf16.mxu0 0
        %656 = vmatpush1.bf16.msra.mxu0 0
        %657 = vmatprep.subr.bf16.mxu0 0
        %658 = vmatpush1.bf16.msra.mxu0 0
        %659 = vmatprep.subr.bf16.mxu0 0
        %660 = vmatpush1.bf16.msra.mxu0 0
        %661 = vmatprep.subr.bf16.mxu0 0
        %662 = vmatpush1.bf16.msra.mxu0 0
        %663 = vmatprep.subr.bf16.mxu0 0
        %664 = vmatpush1.bf16.msra.mxu0 0
        %665 = vmatprep.mubr.bf16.mxu0 0
        %666 = vmatmul.mubr.bf16.gmra.mrb[0].mxu0 %v631
        %v667 = vpop.f32.mrb[0].mxu0
        %v668 = vadd.f32 %v615, %v667
        %v669 = vpop.f32.mrb[0].mxu0
        %v670 = vpop.f32.mrb[0].mxu0
        %v671 = vpop.f32.mrb[0].mxu0
        %672 = vdwg.mxu0
        %v673 = vld [vmem:[#allocation2] sm:$0xf]
        %v674 = vld [vmem:[#allocation2 + $0x4] sm:$0xf]
        %v675 = vld [vmem:[#allocation2 + $0x8] sm:$0xf]
        %v676 = vld [vmem:[#allocation2 + $0xc] sm:$0xf]
        %v677 = vld [vmem:[%s5] sm:$0x1]
        %v679 = vlaneseq
        %v680 = vshrl.u32 %v679, 7
        %v681 = vsub.s32 0, %v680
        %v682 = vrot.slane %v677, %v681
        %v688 = vunpack.c.l.b16 %v673
        %v689 = vunpack.c.l.b16 %v674
        %v690 = vunpack.c.l.b16 %v675
        %v691 = vunpack.c.l.b16 %v676
        %v692 = vpack.c.b16 %v689, %v688
        %v693 = vpack.c.b16 %v691, %v690
        %v697 = vsel %vm629, %v605, 0
        %699 = vmatprep.subr.bf16.mxu0 0
        %700 = vmatpush1.bf16.msra.mxu0 %v692
        %701 = vmatprep.subr.bf16.mxu0 0
        %702 = vmatpush1.bf16.msra.mxu0 %v693
        %703 = vmatprep.subr.bf16.mxu0 0
        %704 = vmatpush1.bf16.msra.mxu0 0
        %705 = vmatprep.subr.bf16.mxu0 0
        %706 = vmatpush1.bf16.msra.mxu0 0
        %707 = vmatprep.subr.bf16.mxu0 0
        %708 = vmatpush1.bf16.msra.mxu0 0
        %709 = vmatprep.subr.bf16.mxu0 0
        %710 = vmatpush1.bf16.msra.mxu0 0
        %711 = vmatprep.subr.bf16.mxu0 0
        %712 = vmatpush1.bf16.msra.mxu0 0
        %713 = vmatprep.subr.bf16.mxu0 0
        %714 = vmatpush1.bf16.msra.mxu0 0
        %715 = vmatprep.subr.bf16.mxu0 0
        %716 = vmatpush1.bf16.msra.mxu0 0
        %717 = vmatprep.subr.bf16.mxu0 0
        %718 = vmatpush1.bf16.msra.mxu0 0
        %719 = vmatprep.subr.bf16.mxu0 0
        %720 = vmatpush1.bf16.msra.mxu0 0
        %721 = vmatprep.subr.bf16.mxu0 0
        %722 = vmatpush1.bf16.msra.mxu0 0
        %723 = vmatprep.subr.bf16.mxu0 0
        %724 = vmatpush1.bf16.msra.mxu0 0
        %725 = vmatprep.subr.bf16.mxu0 0
        %726 = vmatpush1.bf16.msra.mxu0 0
        %727 = vmatprep.subr.bf16.mxu0 0
        %728 = vmatpush1.bf16.msra.mxu0 0
        %729 = vmatprep.subr.bf16.mxu0 0
        %730 = vmatpush1.bf16.msra.mxu0 0
        %731 = vmatprep.mubr.bf16.mxu0 0
        %732 = vmatmul.mubr.bf16.gmra.mrb[0].mxu0 %v697
        %v733 = vpop.f32.mrb[0].mxu0
        %v734 = vadd.f32 %v682, %v733
        %v735 = vpop.f32.mrb[0].mxu0
        %v736 = vpop.f32.mrb[0].mxu0
        %v737 = vpop.f32.mrb[0].mxu0
        %738 = vdwg.mxu0
        %v739 = vpack.c.bf16 %v668, %v668
        %v740 = vpack.c.bf16 %v734, %v734
        %v741 = vlaneseq
        %v742 = vshrl.u32 %v741, 7
        %v743 = vlaneseq
        %v744 = vand.u32 %v743, 127
        %v745 = vsub.s32 %v742, %v744
        %vm746 = vcmp.lt.s32.totalorder %v745, 0
        %v747 = vsub.s32 0, %v745
        %v748 = vsel %vm746, %v747, %v745
        %v749 = vcvt.s32.f32 %v748
        %vm750 = vcmp.le.s32.totalorder %v744, %v742
        %v751 = vmul.f32 %v749, -0.25
        %v752 = vsel %vm750, %v751, -1e+32
        %vm753 = vcmask 64512
        %v755 = vsel %vm753, %v739, 0
        %757 = vmatprep.subr.bf16.mxu0 0
        %758 = vmatpush1.bf16.xpose.msra.mxu0 %v755
        %759 = vmatprep.subr.bf16.mxu0 0
        %760 = vmatpush1.bf16.xpose.msra.mxu0 0
        %761 = vmatprep.subr.bf16.mxu0 0
        %762 = vmatpush1.bf16.xpose.msra.mxu0 0
        %763 = vmatprep.subr.bf16.mxu0 0
        %764 = vmatpush1.bf16.xpose.msra.mxu0 0
        %765 = vmatprep.subr.bf16.mxu0 0
        %766 = vmatpush1.bf16.xpose.msra.mxu0 0
        %767 = vmatprep.subr.bf16.mxu0 0
        %768 = vmatpush1.bf16.xpose.msra.mxu0 0
        %769 = vmatprep.subr.bf16.mxu0 0
        %770 = vmatpush1.bf16.xpose.msra.mxu0 0
        %771 = vmatprep.subr.bf16.mxu0 0
        %772 = vmatpush1.bf16.xpose.msra.mxu0 0
        %773 = vmatprep.subr.bf16.mxu0 0
        %774 = vmatpush1.bf16.xpose.msra.mxu0 0
        %775 = vmatprep.subr.bf16.mxu0 0
        %776 = vmatpush1.bf16.xpose.msra.mxu0 0
        %777 = vmatprep.subr.bf16.mxu0 0
        %778 = vmatpush1.bf16.xpose.msra.mxu0 0
        %779 = vmatprep.subr.bf16.mxu0 0
        %780 = vmatpush1.bf16.xpose.msra.mxu0 0
        %781 = vmatprep.subr.bf16.mxu0 0
        %782 = vmatpush1.bf16.xpose.msra.mxu0 0
        %783 = vmatprep.subr.bf16.mxu0 0
        %784 = vmatpush1.bf16.xpose.msra.mxu0 0
        %785 = vmatprep.subr.bf16.mxu0 0
        %786 = vmatpush1.bf16.xpose.msra.mxu0 0
        %787 = vmatprep.subr.bf16.mxu0 0
        %788 = vmatpush1.bf16.xpose.msra.mxu0 0
        %789 = vmatprep.mubr.bf16.mxu0 0
        %790 = vmatmul.mubr.bf16.gmra.mrb[0].mxu0 %v755
        %v791 = vpop.f32.mrb[0].mxu0
        %v792 = vadd.f32 %v752, %v791
        %v793 = vpop.f32.mrb[0].mxu0
        %v794 = vpop.f32.mrb[0].mxu0
        %v795 = vpop.f32.mrb[0].mxu0
        %796 = vdwg.mxu0
        %v797 = vsel %vm753, %v792, -inf
        %798 = vmax.xlane.f32.xlu0 %v797
        %v799 = vpop.xlane.xlu0 %798
        %v800 = vsub.f32 %v792, %v799
        %v801 = vmul.f32 %v800, 1.442695
        %v802 = vpow.pop %v801
        %v803 = vsel %vm753, %v802, 0.0
        %804 = vadd.xlane.f32.xlu0 %v803
        %v805 = vpop.xlane.xlu0 %804
        %v806 = vrcp.pop %v805
        %v807 = vmul.f32 1.0, %v806
        %v808 = vmul.f32 %v802, %v807
        %v809 = vpack.c.bf16 %v808, %v808
        %v811 = vsel %vm753, %v809, 0
        %vm813 = vcmask 1043456
        %v815 = vsel %vm813, %v740, 0
        %817 = vmatprep.subr.bf16.mxu0 0
        %818 = vmatpush1.bf16.msra.mxu0 %v815
        %819 = vmatprep.subr.bf16.mxu0 0
        %820 = vmatpush1.bf16.msra.mxu0 0
        %821 = vmatprep.subr.bf16.mxu0 0
        %822 = vmatpush1.bf16.msra.mxu0 0
        %823 = vmatprep.subr.bf16.mxu0 0
        %824 = vmatpush1.bf16.msra.mxu0 0
        %825 = vmatprep.subr.bf16.mxu0 0
        %826 = vmatpush1.bf16.msra.mxu0 0
        %827 = vmatprep.subr.bf16.mxu0 0
        %828 = vmatpush1.bf16.msra.mxu0 0
        %829 = vmatprep.subr.bf16.mxu0 0
        %830 = vmatpush1.bf16.msra.mxu0 0
        %831 = vmatprep.subr.bf16.mxu0 0
        %832 = vmatpush1.bf16.msra.mxu0 0
        %833 = vmatprep.subr.bf16.mxu0 0
        %834 = vmatpush1.bf16.msra.mxu0 0
        %835 = vmatprep.subr.bf16.mxu0 0
        %836 = vmatpush1.bf16.msra.mxu0 0
        %837 = vmatprep.subr.bf16.mxu0 0
        %838 = vmatpush1.bf16.msra.mxu0 0
        %839 = vmatprep.subr.bf16.mxu0 0
        %840 = vmatpush1.bf16.msra.mxu0 0
        %841 = vmatprep.subr.bf16.mxu0 0
        %842 = vmatpush1.bf16.msra.mxu0 0
        %843 = vmatprep.subr.bf16.mxu0 0
        %844 = vmatpush1.bf16.msra.mxu0 0
        %845 = vmatprep.subr.bf16.mxu0 0
        %846 = vmatpush1.bf16.msra.mxu0 0
        %847 = vmatprep.subr.bf16.mxu0 0
        %848 = vmatpush1.bf16.msra.mxu0 0
        %849 = vmatprep.mubr.bf16.mxu0 0
        %850 = vmatmul.mubr.bf16.gmra.mrb[0].mxu0 %v811
        %v851 = vpop.f32.mrb[0].mxu0
        %v852 = vadd.f32 0.0, %v851
        %v853 = vpop.f32.mrb[0].mxu0
        %v854 = vpop.f32.mrb[0].mxu0
        %v855 = vpop.f32.mrb[0].mxu0
        %856 = vdwg.mxu0
        %v857 = vpack.c.bf16 %v852, %v852
        %v858 = vmul.f32 %v749, -0.0625
        %v859 = vsel %vm750, %v858, -1e+32
        %861 = vrot.lane.b32.xlu0 %v739, 120
        %v862 = vpop.permute.xlu0 %861
        %v864 = vsel %vm753, %v862, 0
        %866 = vmatprep.subr.bf16.mxu0 0
        %867 = vmatpush1.bf16.xpose.msra.mxu0 %v864
        %868 = vmatprep.subr.bf16.mxu0 0
        %869 = vmatpush1.bf16.xpose.msra.mxu0 0
        %870 = vmatprep.subr.bf16.mxu0 0
        %871 = vmatpush1.bf16.xpose.msra.mxu0 0
        %872 = vmatprep.subr.bf16.mxu0 0
        %873 = vmatpush1.bf16.xpose.msra.mxu0 0
        %874 = vmatprep.subr.bf16.mxu0 0
        %875 = vmatpush1.bf16.xpose.msra.mxu0 0
        %876 = vmatprep.subr.bf16.mxu0 0
        %877 = vmatpush1.bf16.xpose.msra.mxu0 0
        %878 = vmatprep.subr.bf16.mxu0 0
        %879 = vmatpush1.bf16.xpose.msra.mxu0 0
        %880 = vmatprep.subr.bf16.mxu0 0
        %881 = vmatpush1.bf16.xpose.msra.mxu0 0
        %882 = vmatprep.subr.bf16.mxu0 0
        %883 = vmatpush1.bf16.xpose.msra.mxu0 0
        %884 = vmatprep.subr.bf16.mxu0 0
        %885 = vmatpush1.bf16.xpose.msra.mxu0 0
        %886 = vmatprep.subr.bf16.mxu0 0
        %887 = vmatpush1.bf16.xpose.msra.mxu0 0
        %888 = vmatprep.subr.bf16.mxu0 0
        %889 = vmatpush1.bf16.xpose.msra.mxu0 0
        %890 = vmatprep.subr.bf16.mxu0 0
        %891 = vmatpush1.bf16.xpose.msra.mxu0 0
        %892 = vmatprep.subr.bf16.mxu0 0
        %893 = vmatpush1.bf16.xpose.msra.mxu0 0
        %894 = vmatprep.subr.bf16.mxu0 0
        %895 = vmatpush1.bf16.xpose.msra.mxu0 0
        %896 = vmatprep.subr.bf16.mxu0 0
        %897 = vmatpush1.bf16.xpose.msra.mxu0 0
        %898 = vmatprep.mubr.bf16.mxu0 0
        %899 = vmatmul.mubr.bf16.gmra.mrb[0].mxu0 %v864
        %v900 = vpop.f32.mrb[0].mxu0
        %v901 = vadd.f32 %v859, %v900
        %v902 = vpop.f32.mrb[0].mxu0
        %v903 = vpop.f32.mrb[0].mxu0
        %v904 = vpop.f32.mrb[0].mxu0
        %905 = vdwg.mxu0
        %v906 = vsel %vm753, %v901, -inf
        %907 = vmax.xlane.f32.xlu0 %v906
        %v908 = vpop.xlane.xlu0 %907
        %v909 = vsub.f32 %v901, %v908
        %v910 = vmul.f32 %v909, 1.442695
        %v911 = vpow.pop %v910
        %v912 = vsel %vm753, %v911, 0.0
        %913 = vadd.xlane.f32.xlu0 %v912
        %v914 = vpop.xlane.xlu0 %913
        %v915 = vrcp.pop %v914
        %v916 = vmul.f32 1.0, %v915
        %v917 = vmul.f32 %v911, %v916
        %v918 = vpack.c.bf16 %v917, %v917
        %920 = vrot.lane.b32.xlu0 %v740, 120
        %v921 = vpop.permute.xlu0 %920
        %v923 = vsel %vm753, %v918, 0
        %v926 = vsel %vm813, %v921, 0
        %928 = vmatprep.subr.bf16.mxu0 0
        %929 = vmatpush1.bf16.msra.mxu0 %v926
        %930 = vmatprep.subr.bf16.mxu0 0
        %931 = vmatpush1.bf16.msra.mxu0 0
        %932 = vmatprep.subr.bf16.mxu0 0
        %933 = vmatpush1.bf16.msra.mxu0 0
        %934 = vmatprep.subr.bf16.mxu0 0
        %935 = vmatpush1.bf16.msra.mxu0 0
        %936 = vmatprep.subr.bf16.mxu0 0
        %937 = vmatpush1.bf16.msra.mxu0 0
        %938 = vmatprep.subr.bf16.mxu0 0
        %939 = vmatpush1.bf16.msra.mxu0 0
        %940 = vmatprep.subr.bf16.mxu0 0
        %941 = vmatpush1.bf16.msra.mxu0 0
        %942 = vmatprep.subr.bf16.mxu0 0
        %943 = vmatpush1.bf16.msra.mxu0 0
        %944 = vmatprep.subr.bf16.mxu0 0
        %945 = vmatpush1.bf16.msra.mxu0 0
        %946 = vmatprep.subr.bf16.mxu0 0
        %947 = vmatpush1.bf16.msra.mxu0 0
        %948 = vmatprep.subr.bf16.mxu0 0
        %949 = vmatpush1.bf16.msra.mxu0 0
        %950 = vmatprep.subr.bf16.mxu0 0
        %951 = vmatpush1.bf16.msra.mxu0 0
        %952 = vmatprep.subr.bf16.mxu0 0
        %953 = vmatpush1.bf16.msra.mxu0 0
        %954 = vmatprep.subr.bf16.mxu0 0
        %955 = vmatpush1.bf16.msra.mxu0 0
        %956 = vmatprep.subr.bf16.mxu0 0
        %957 = vmatpush1.bf16.msra.mxu0 0
        %958 = vmatprep.subr.bf16.mxu0 0
        %959 = vmatpush1.bf16.msra.mxu0 0
        %960 = vmatprep.mubr.bf16.mxu0 0
        %961 = vmatmul.mubr.bf16.gmra.mrb[0].mxu0 %v923
        %v962 = vpop.f32.mrb[0].mxu0
        %v963 = vadd.f32 0.0, %v962
        %v964 = vpop.f32.mrb[0].mxu0
        %v965 = vpop.f32.mrb[0].mxu0
        %v966 = vpop.f32.mrb[0].mxu0
        %967 = vdwg.mxu0
        %v968 = vpack.c.bf16 %v963, %v963
        %v969 = vmul.f32 %v749, -0.015625
        %v970 = vsel %vm750, %v969, -1e+32
        %971 = vrot.lane.b32.xlu0 %v739, 112
        %v972 = vpop.permute.xlu0 %971
        %v974 = vsel %vm753, %v972, 0
        %976 = vmatprep.subr.bf16.mxu0 0
        %977 = vmatpush1.bf16.xpose.msra.mxu0 %v974
        %978 = vmatprep.subr.bf16.mxu0 0
        %979 = vmatpush1.bf16.xpose.msra.mxu0 0
        %980 = vmatprep.subr.bf16.mxu0 0
        %981 = vmatpush1.bf16.xpose.msra.mxu0 0
        %982 = vmatprep.subr.bf16.mxu0 0
        %983 = vmatpush1.bf16.xpose.msra.mxu0 0
        %984 = vmatprep.subr.bf16.mxu0 0
        %985 = vmatpush1.bf16.xpose.msra.mxu0 0
        %986 = vmatprep.subr.bf16.mxu0 0
        %987 = vmatpush1.bf16.xpose.msra.mxu0 0
        %988 = vmatprep.subr.bf16.mxu0 0
        %989 = vmatpush1.bf16.xpose.msra.mxu0 0
        %990 = vmatprep.subr.bf16.mxu0 0
        %991 = vmatpush1.bf16.xpose.msra.mxu0 0
        %992 = vmatprep.subr.bf16.mxu0 0
        %993 = vmatpush1.bf16.xpose.msra.mxu0 0
        %994 = vmatprep.subr.bf16.mxu0 0
        %995 = vmatpush1.bf16.xpose.msra.mxu0 0
        %996 = vmatprep.subr.bf16.mxu0 0
        %997 = vmatpush1.bf16.xpose.msra.mxu0 0
        %998 = vmatprep.subr.bf16.mxu0 0
        %999 = vmatpush1.bf16.xpose.msra.mxu0 0
        %1000 = vmatprep.subr.bf16.mxu0 0
        %1001 = vmatpush1.bf16.xpose.msra.mxu0 0
        %1002 = vmatprep.subr.bf16.mxu0 0
        %1003 = vmatpush1.bf16.xpose.msra.mxu0 0
        %1004 = vmatprep.subr.bf16.mxu0 0
        %1005 = vmatpush1.bf16.xpose.msra.mxu0 0
        %1006 = vmatprep.subr.bf16.mxu0 0
        %1007 = vmatpush1.bf16.xpose.msra.mxu0 0
        %1008 = vmatprep.mubr.bf16.mxu0 0
        %1009 = vmatmul.mubr.bf16.gmra.mrb[0].mxu0 %v974
        %v1010 = vpop.f32.mrb[0].mxu0
        %v1011 = vadd.f32 %v970, %v1010
        %v1012 = vpop.f32.mrb[0].mxu0
        %v1013 = vpop.f32.mrb[0].mxu0
        %v1014 = vpop.f32.mrb[0].mxu0
        %1015 = vdwg.mxu0
        %v1016 = vsel %vm753, %v1011, -inf
        %1017 = vmax.xlane.f32.xlu0 %v1016
        %v1018 = vpop.xlane.xlu0 %1017
        %v1019 = vsub.f32 %v1011, %v1018
        %v1020 = vmul.f32 %v1019, 1.442695
        %v1021 = vpow.pop %v1020
        %v1022 = vsel %vm753, %v1021, 0.0
        %1023 = vadd.xlane.f32.xlu0 %v1022
        %v1024 = vpop.xlane.xlu0 %1023
        %v1025 = vrcp.pop %v1024
        %v1026 = vmul.f32 1.0, %v1025
        %v1027 = vmul.f32 %v1021, %v1026
        %v1028 = vpack.c.bf16 %v1027, %v1027
        %1029 = vrot.lane.b32.xlu0 %v740, 112
        %v1030 = vpop.permute.xlu0 %1029
        %v1032 = vsel %vm753, %v1028, 0
        %v1035 = vsel %vm813, %v1030, 0
        %1037 = vmatprep.subr.bf16.mxu0 0
        %1038 = vmatpush1.bf16.msra.mxu0 %v1035
        %1039 = vmatprep.subr.bf16.mxu0 0
        %1040 = vmatpush1.bf16.msra.mxu0 0
        %1041 = vmatprep.subr.bf16.mxu0 0
        %1042 = vmatpush1.bf16.msra.mxu0 0
        %1043 = vmatprep.subr.bf16.mxu0 0
        %1044 = vmatpush1.bf16.msra.mxu0 0
        %1045 = vmatprep.subr.bf16.mxu0 0
        %1046 = vmatpush1.bf16.msra.mxu0 0
        %1047 = vmatprep.subr.bf16.mxu0 0
        %1048 = vmatpush1.bf16.msra.mxu0 0
        %1049 = vmatprep.subr.bf16.mxu0 0
        %1050 = vmatpush1.bf16.msra.mxu0 0
        %1051 = vmatprep.subr.bf16.mxu0 0
        %1052 = vmatpush1.bf16.msra.mxu0 0
        %1053 = vmatprep.subr.bf16.mxu0 0
        %1054 = vmatpush1.bf16.msra.mxu0 0
        %1055 = vmatprep.subr.bf16.mxu0 0
        %1056 = vmatpush1.bf16.msra.mxu0 0
        %1057 = vmatprep.subr.bf16.mxu0 0
        %1058 = vmatpush1.bf16.msra.mxu0 0
        %1059 = vmatprep.subr.bf16.mxu0 0
        %1060 = vmatpush1.bf16.msra.mxu0 0
        %1061 = vmatprep.subr.bf16.mxu0 0
        %1062 = vmatpush1.bf16.msra.mxu0 0
        %1063 = vmatprep.subr.bf16.mxu0 0
        %1064 = vmatpush1.bf16.msra.mxu0 0
        %1065 = vmatprep.subr.bf16.mxu0 0
        %1066 = vmatpush1.bf16.msra.mxu0 0
        %1067 = vmatprep.subr.bf16.mxu0 0
        %1068 = vmatpush1.bf16.msra.mxu0 0
        %1069 = vmatprep.mubr.bf16.mxu0 0
        %1070 = vmatmul.mubr.bf16.gmra.mrb[0].mxu0 %v1032
        %v1071 = vpop.f32.mrb[0].mxu0
        %v1072 = vadd.f32 0.0, %v1071
        %v1073 = vpop.f32.mrb[0].mxu0
        %v1074 = vpop.f32.mrb[0].mxu0
        %v1075 = vpop.f32.mrb[0].mxu0
        %1076 = vdwg.mxu0
        %v1077 = vpack.c.bf16 %v1072, %v1072
        %v1078 = vmul.f32 %v749, -0.00390625
        %v1079 = vsel %vm750, %v1078, -1e+32
        %1080 = vrot.lane.b32.xlu0 %v739, 104
        %v1081 = vpop.permute.xlu0 %1080
        %v1083 = vsel %vm753, %v1081, 0
        %1085 = vmatprep.subr.bf16.mxu0 0
        %1086 = vmatpush1.bf16.xpose.msra.mxu0 %v1083
        %1087 = vmatprep.subr.bf16.mxu0 0
        %1088 = vmatpush1.bf16.xpose.msra.mxu0 0
        %1089 = vmatprep.subr.bf16.mxu0 0
        %1090 = vmatpush1.bf16.xpose.msra.mxu0 0
        %1091 = vmatprep.subr.bf16.mxu0 0
        %1092 = vmatpush1.bf16.xpose.msra.mxu0 0
        %1093 = vmatprep.subr.bf16.mxu0 0
        %1094 = vmatpush1.bf16.xpose.msra.mxu0 0
        %1095 = vmatprep.subr.bf16.mxu0 0
        %1096 = vmatpush1.bf16.xpose.msra.mxu0 0
        %1097 = vmatprep.subr.bf16.mxu0 0
        %1098 = vmatpush1.bf16.xpose.msra.mxu0 0
        %1099 = vmatprep.subr.bf16.mxu0 0
        %1100 = vmatpush1.bf16.xpose.msra.mxu0 0
        %1101 = vmatprep.subr.bf16.mxu0 0
        %1102 = vmatpush1.bf16.xpose.msra.mxu0 0
        %1103 = vmatprep.subr.bf16.mxu0 0
        %1104 = vmatpush1.bf16.xpose.msra.mxu0 0
        %1105 = vmatprep.subr.bf16.mxu0 0
        %1106 = vmatpush1.bf16.xpose.msra.mxu0 0
        %1107 = vmatprep.subr.bf16.mxu0 0
        %1108 = vmatpush1.bf16.xpose.msra.mxu0 0
        %1109 = vmatprep.subr.bf16.mxu0 0
        %1110 = vmatpush1.bf16.xpose.msra.mxu0 0
        %1111 = vmatprep.subr.bf16.mxu0 0
        %1112 = vmatpush1.bf16.xpose.msra.mxu0 0
        %1113 = vmatprep.subr.bf16.mxu0 0
        %1114 = vmatpush1.bf16.xpose.msra.mxu0 0
        %1115 = vmatprep.subr.bf16.mxu0 0
        %1116 = vmatpush1.bf16.xpose.msra.mxu0 0
        %1117 = vmatprep.mubr.bf16.mxu0 0
        %1118 = vmatmul.mubr.bf16.gmra.mrb[0].mxu0 %v1083
        %v1119 = vpop.f32.mrb[0].mxu0
        %v1120 = vadd.f32 %v1079, %v1119
        %v1121 = vpop.f32.mrb[0].mxu0
        %v1122 = vpop.f32.mrb[0].mxu0
        %v1123 = vpop.f32.mrb[0].mxu0
        %1124 = vdwg.mxu0
        %v1125 = vsel %vm753, %v1120, -inf
        %1126 = vmax.xlane.f32.xlu0 %v1125
        %v1127 = vpop.xlane.xlu0 %1126
        %v1128 = vsub.f32 %v1120, %v1127
        %v1129 = vmul.f32 %v1128, 1.442695
        %v1130 = vpow.pop %v1129
        %v1131 = vsel %vm753, %v1130, 0.0
        %1132 = vadd.xlane.f32.xlu0 %v1131
        %v1133 = vpop.xlane.xlu0 %1132
        %v1134 = vrcp.pop %v1133
        %v1135 = vmul.f32 1.0, %v1134
        %v1136 = vmul.f32 %v1130, %v1135
        %v1137 = vpack.c.bf16 %v1136, %v1136
        %1138 = vrot.lane.b32.xlu0 %v740, 104
        %v1139 = vpop.permute.xlu0 %1138
        %v1141 = vsel %vm753, %v1137, 0
        %v1144 = vsel %vm813, %v1139, 0
        %1146 = vmatprep.subr.bf16.mxu0 0
        %1147 = vmatpush1.bf16.msra.mxu0 %v1144
        %1148 = vmatprep.subr.bf16.mxu0 0
        %1149 = vmatpush1.bf16.msra.mxu0 0
        %1150 = vmatprep.subr.bf16.mxu0 0
        %1151 = vmatpush1.bf16.msra.mxu0 0
        %1152 = vmatprep.subr.bf16.mxu0 0
        %1153 = vmatpush1.bf16.msra.mxu0 0
        %1154 = vmatprep.subr.bf16.mxu0 0
        %1155 = vmatpush1.bf16.msra.mxu0 0
        %1156 = vmatprep.subr.bf16.mxu0 0
        %1157 = vmatpush1.bf16.msra.mxu0 0
        %1158 = vmatprep.subr.bf16.mxu0 0
        %1159 = vmatpush1.bf16.msra.mxu0 0
        %1160 = vmatprep.subr.bf16.mxu0 0
        %1161 = vmatpush1.bf16.msra.mxu0 0
        %1162 = vmatprep.subr.bf16.mxu0 0
        %1163 = vmatpush1.bf16.msra.mxu0 0
        %1164 = vmatprep.subr.bf16.mxu0 0
        %1165 = vmatpush1.bf16.msra.mxu0 0
        %1166 = vmatprep.subr.bf16.mxu0 0
        %1167 = vmatpush1.bf16.msra.mxu0 0
        %1168 = vmatprep.subr.bf16.mxu0 0
        %1169 = vmatpush1.bf16.msra.mxu0 0
        %1170 = vmatprep.subr.bf16.mxu0 0
        %1171 = vmatpush1.bf16.msra.mxu0 0
        %1172 = vmatprep.subr.bf16.mxu0 0
        %1173 = vmatpush1.bf16.msra.mxu0 0
        %1174 = vmatprep.subr.bf16.mxu0 0
        %1175 = vmatpush1.bf16.msra.mxu0 0
        %1176 = vmatprep.subr.bf16.mxu0 0
        %1177 = vmatpush1.bf16.msra.mxu0 0
        %1178 = vmatprep.mubr.bf16.mxu0 0
        %1179 = vmatmul.mubr.bf16.gmra.mrb[0].mxu0 %v1141
        %v1180 = vpop.f32.mrb[0].mxu0
        %v1181 = vadd.f32 0.0, %v1180
        %v1182 = vpop.f32.mrb[0].mxu0
        %v1183 = vpop.f32.mrb[0].mxu0
        %v1184 = vpop.f32.mrb[0].mxu0
        %1185 = vdwg.mxu0
        %v1186 = vpack.c.bf16 %v1181, %v1181
        %1188 = vrot.lane.b32.xlu0 %v968, 8
        %v1189 = vpop.permute.xlu0 %1188
        %1191 = vrot.lane.b32.xlu0 %v1077, 16
        %v1192 = vpop.permute.xlu0 %1191
        %1194 = vrot.lane.b32.xlu0 %v1186, 24
        %v1195 = vpop.permute.xlu0 %1194
        %v1198 = vsel %vm753, %v857, %v1189
        %vm1199 = vcmask 130048
        %v1201 = vsel %vm1199, %v1198, %v1192
        %vm1202 = vcmask 195584
        %v1204 = vsel %vm1202, %v1201, %v1195
        %v1205 = vld [vmem:[#allocation5] sm:$0xf]
        %v1206 = vld [vmem:[#allocation5 + $0x4] sm:$0xf]
        %v1207 = vld [vmem:[#allocation5 + $0x8] sm:$0xf]
        %v1208 = vld [vmem:[#allocation5 + $0xc] sm:$0xf]
        %v1209 = vld [vmem:[#allocation7] sm:$0x1]
        %v1211 = vlaneseq
        %v1212 = vshrl.u32 %v1211, 7
        %v1213 = vsub.s32 0, %v1212
        %v1214 = vrot.slane %v1209, %v1213
        %v1220 = vunpack.c.l.b16 %v1205
        %v1221 = vunpack.c.l.b16 %v1206
        %v1222 = vunpack.c.l.b16 %v1207
        %v1223 = vunpack.c.l.b16 %v1208
        %v1224 = vpack.c.b16 %v1221, %v1220
        %v1225 = vpack.c.b16 %v1223, %v1222
        %v1228 = vsel %vm629, %v1204, 0
        %1230 = vmatprep.subr.bf16.mxu0 0
        %1231 = vmatpush1.bf16.msra.mxu0 %v1224
        %1232 = vmatprep.subr.bf16.mxu0 0
        %1233 = vmatpush1.bf16.msra.mxu0 %v1225
        %1234 = vmatprep.subr.bf16.mxu0 0
        %1235 = vmatpush1.bf16.msra.mxu0 0
        %1236 = vmatprep.subr.bf16.mxu0 0
        %1237 = vmatpush1.bf16.msra.mxu0 0
        %1238 = vmatprep.subr.bf16.mxu0 0
        %1239 = vmatpush1.bf16.msra.mxu0 0
        %1240 = vmatprep.subr.bf16.mxu0 0
        %1241 = vmatpush1.bf16.msra.mxu0 0
        %1242 = vmatprep.subr.bf16.mxu0 0
        %1243 = vmatpush1.bf16.msra.mxu0 0
        %1244 = vmatprep.subr.bf16.mxu0 0
        %1245 = vmatpush1.bf16.msra.mxu0 0
        %1246 = vmatprep.subr.bf16.mxu0 0
        %1247 = vmatpush1.bf16.msra.mxu0 0
        %1248 = vmatprep.subr.bf16.mxu0 0
        %1249 = vmatpush1.bf16.msra.mxu0 0
        %1250 = vmatprep.subr.bf16.mxu0 0
        %1251 = vmatpush1.bf16.msra.mxu0 0
        %1252 = vmatprep.subr.bf16.mxu0 0
        %1253 = vmatpush1.bf16.msra.mxu0 0
        %1254 = vmatprep.subr.bf16.mxu0 0
        %1255 = vmatpush1.bf16.msra.mxu0 0
        %1256 = vmatprep.subr.bf16.mxu0 0
        %1257 = vmatpush1.bf16.msra.mxu0 0
        %1258 = vmatprep.subr.bf16.mxu0 0
        %1259 = vmatpush1.bf16.msra.mxu0 0
        %1260 = vmatprep.subr.bf16.mxu0 0
        %1261 = vmatpush1.bf16.msra.mxu0 0
        %1262 = vmatprep.mubr.bf16.mxu0 0
        %1263 = vmatmul.mubr.bf16.gmra.mrb[0].mxu0 %v1228
        %v1264 = vpop.f32.mrb[0].mxu0
        %v1265 = vadd.f32 %v1214, %v1264
        %v1266 = vpop.f32.mrb[0].mxu0
        %v1267 = vpop.f32.mrb[0].mxu0
        %v1268 = vpop.f32.mrb[0].mxu0
        %1269 = vdwg.mxu0
        %v1270 = vadd.f32 %v602, %v1265
        %v1271 = vld [vmem:[#allocation8] sm:$0x1]
        %v1272 = vld [vmem:[#allocation10] sm:$0x1]
        %v1273 = vsel %vm629, %v1270, 0.0
        %1274 = vadd.xlane.f32.xlu0 %v1273
        %v1275 = vpop.xlane.xlu0 %1274
        %v1276 = vrcp.pop 32.0
        %v1277 = vmul.f32 %v1275, %v1276
        %v1278 = vsub.f32 %v1270, %v1277
        %v1279 = vmul.f32 %v1278, %v1278
        %v1280 = vsel %vm629, %v1279, 0.0
        %1281 = vadd.xlane.f32.xlu0 %v1280
        %v1282 = vpop.xlane.xlu0 %1281
        %v1283 = vmul.f32 %v1282, %v1276
        %v1284 = vadd.f32 %v1283, 1e-05
        %v1285 = vrsqrt.pop %v1284
        %v1286 = vmul.f32 %v1278, %v1285
        %v1288 = vlaneseq
        %v1289 = vshrl.u32 %v1288, 7
        %v1290 = vsub.s32 0, %v1289
        %v1291 = vrot.slane %v1271, %v1290
        %v1293 = vmul.f32 %v1286, %v1291
        %v1295 = vlaneseq
        %v1296 = vshrl.u32 %v1295, 7
        %v1297 = vsub.s32 0, %v1296
        %v1298 = vrot.slane %v1272, %v1297
        %v1300 = vadd.f32 %v1293, %v1298
        %v1301 = vpack.c.bf16 %v1300, %v1300
        %v1302 = vld [vmem:[%s10] sm:$0xf]
        %v1303 = vld [vmem:[%s10 + $0x4] sm:$0xf]
        %v1304 = vld [vmem:[%s10 + $0x8] sm:$0xf]
        %v1305 = vld [vmem:[%s10 + $0xc] sm:$0xf]
        %v1306 = vld [vmem:[%s11] sm:$0x1]
        %v1308 = vlaneseq
        %v1309 = vshrl.u32 %v1308, 7
        %v1310 = vsub.s32 0, %v1309
        %v1311 = vrot.slane %v1306, %v1310
        %v1317 = vunpack.c.l.b16 %v1302
        %v1318 = vunpack.c.l.b16 %v1303
        %v1319 = vunpack.c.l.b16 %v1304
        %v1320 = vunpack.c.l.b16 %v1305
        %v1321 = vpack.c.b16 %v1318, %v1317
        %v1322 = vpack.c.b16 %v1320, %v1319
        %v1326 = vsel %vm629, %v1301, 0
        %1328 = vmatprep.subr.bf16.mxu0 0
        %1329 = vmatpush1.bf16.msra.mxu0 %v1321
        %1330 = vmatprep.subr.bf16.mxu0 0
        %1331 = vmatpush1.bf16.msra.mxu0 %v1322
        %1332 = vmatprep.subr.bf16.mxu0 0
        %1333 = vmatpush1.bf16.msra.mxu0 0
        %1334 = vmatprep.subr.bf16.mxu0 0
        %1335 = vmatpush1.bf16.msra.mxu0 0
        %1336 = vmatprep.subr.bf16.mxu0 0
        %1337 = vmatpush1.bf16.msra.mxu0 0
        %1338 = vmatprep.subr.bf16.mxu0 0
        %1339 = vmatpush1.bf16.msra.mxu0 0
        %1340 = vmatprep.subr.bf16.mxu0 0
        %1341 = vmatpush1.bf16.msra.mxu0 0
        %1342 = vmatprep.subr.bf16.mxu0 0
        %1343 = vmatpush1.bf16.msra.mxu0 0
        %1344 = vmatprep.subr.bf16.mxu0 0
        %1345 = vmatpush1.bf16.msra.mxu0 0
        %1346 = vmatprep.subr.bf16.mxu0 0
        %1347 = vmatpush1.bf16.msra.mxu0 0
        %1348 = vmatprep.subr.bf16.mxu0 0
        %1349 = vmatpush1.bf16.msra.mxu0 0
        %1350 = vmatprep.subr.bf16.mxu0 0
        %1351 = vmatpush1.bf16.msra.mxu0 0
        %1352 = vmatprep.subr.bf16.mxu0 0
        %1353 = vmatpush1.bf16.msra.mxu0 0
        %1354 = vmatprep.subr.bf16.mxu0 0
        %1355 = vmatpush1.bf16.msra.mxu0 0
        %1356 = vmatprep.subr.bf16.mxu0 0
        %1357 = vmatpush1.bf16.msra.mxu0 0
        %1358 = vmatprep.subr.bf16.mxu0 0
        %1359 = vmatpush1.bf16.msra.mxu0 0
        %1360 = vmatprep.mubr.bf16.mxu0 0
        %1361 = vmatmul.mubr.bf16.gmra.mrb[0].mxu0 %v1326
        %v1362 = vpop.f32.mrb[0].mxu0
        %v1363 = vadd.f32 %v1311, %v1362
        %v1364 = vpop.f32.mrb[0].mxu0
        %v1365 = vpop.f32.mrb[0].mxu0
        %v1366 = vpop.f32.mrb[0].mxu0
        %1367 = vdwg.mxu0
        %v1368 = vmax.f32 %v1363, 0.0
        %v1369 = vpack.c.bf16 %v1368, %v1368
        %v1370 = vld [vmem:[%s12] sm:$0xf]
        %v1371 = vld [vmem:[%s12 + $0x4] sm:$0xf]
        %v1372 = vld [vmem:[%s12 + $0x8] sm:$0xf]
        %v1373 = vld [vmem:[%s12 + $0xc] sm:$0xf]
        %v1374 = vld [vmem:[%s12 + $0x10] sm:$0xf]
        %v1375 = vld [vmem:[%s12 + $0x14] sm:$0xf]
        %v1376 = vld [vmem:[%s12 + $0x18] sm:$0xf]
        %v1377 = vld [vmem:[%s12 + $0x1c] sm:$0xf]
        %v1378 = vld [vmem:[%s13] sm:$0x1]
        %v1380 = vlaneseq
        %v1381 = vshrl.u32 %v1380, 7
        %v1382 = vsub.s32 0, %v1381
        %v1383 = vrot.slane %v1378, %v1382
        %v1393 = vunpack.c.l.b16 %v1370
        %v1394 = vunpack.c.l.b16 %v1371
        %v1395 = vunpack.c.l.b16 %v1372
        %v1396 = vunpack.c.l.b16 %v1373
        %v1397 = vunpack.c.l.b16 %v1374
        %v1398 = vunpack.c.l.b16 %v1375
        %v1399 = vunpack.c.l.b16 %v1376
        %v1400 = vunpack.c.l.b16 %v1377
        %v1401 = vpack.c.b16 %v1394, %v1393
        %v1402 = vpack.c.b16 %v1396, %v1395
        %v1403 = vpack.c.b16 %v1398, %v1397
        %v1404 = vpack.c.b16 %v1400, %v1399
        %vm1409 = vcmask 523264
        %v1411 = vsel %vm1409, %v1369, 0
        %1413 = vmatprep.subr.bf16.mxu0 0
        %1414 = vmatpush1.bf16.msra.mxu0 %v1401
        %1415 = vmatprep.subr.bf16.mxu0 0
        %1416 = vmatpush1.bf16.msra.mxu0 %v1402
        %1417 = vmatprep.subr.bf16.mxu0 0
        %1418 = vmatpush1.bf16.msra.mxu0 %v1403
        %1419 = vmatprep.subr.bf16.mxu0 0
        %1420 = vmatpush1.bf16.msra.mxu0 %v1404
        %1421 = vmatprep.subr.bf16.mxu0 0
        %1422 = vmatpush1.bf16.msra.mxu0 0
        %1423 = vmatprep.subr.bf16.mxu0 0
        %1424 = vmatpush1.bf16.msra.mxu0 0
        %1425 = vmatprep.subr.bf16.mxu0 0
        %1426 = vmatpush1.bf16.msra.mxu0 0
        %1427 = vmatprep.subr.bf16.mxu0 0
        %1428 = vmatpush1.bf16.msra.mxu0 0
        %1429 = vmatprep.subr.bf16.mxu0 0
        %1430 = vmatpush1.bf16.msra.mxu0 0
        %1431 = vmatprep.subr.bf16.mxu0 0
        %1432 = vmatpush1.bf16.msra.mxu0 0
        %1433 = vmatprep.subr.bf16.mxu0 0
        %1434 = vmatpush1.bf16.msra.mxu0 0
        %1435 = vmatprep.subr.bf16.mxu0 0
        %1436 = vmatpush1.bf16.msra.mxu0 0
        %1437 = vmatprep.subr.bf16.mxu0 0
        %1438 = vmatpush1.bf16.msra.mxu0 0
        %1439 = vmatprep.subr.bf16.mxu0 0
        %1440 = vmatpush1.bf16.msra.mxu0 0
        %1441 = vmatprep.subr.bf16.mxu0 0
        %1442 = vmatpush1.bf16.msra.mxu0 0
        %1443 = vmatprep.subr.bf16.mxu0 0
        %1444 = vmatpush1.bf16.msra.mxu0 0
        %1445 = vmatprep.mubr.bf16.mxu0 0
        %1446 = vmatmul.mubr.bf16.gmra.mrb[0].mxu0 %v1411
        %v1447 = vpop.f32.mrb[0].mxu0
        %v1448 = vadd.f32 %v1383, %v1447
        %v1449 = vpop.f32.mrb[0].mxu0
        %v1450 = vpop.f32.mrb[0].mxu0
        %v1451 = vpop.f32.mrb[0].mxu0
        %1452 = vdwg.mxu0
        %v1453 = vadd.f32 %v1300, %v1448
        %v1454 = vld [vmem:[%s14] sm:$0x1]
        %v1455 = vld [vmem:[%s15] sm:$0x1]
        %v1456 = vsel %vm629, %v1453, 0.0
        %1457 = vadd.xlane.f32.xlu0 %v1456
        %v1458 = vpop.xlane.xlu0 %1457
        %v1459 = vmul.f32 %v1458, %v1276
        %v1460 = vsub.f32 %v1453, %v1459
        %v1461 = vmul.f32 %v1460, %v1460
        %v1462 = vsel %vm629, %v1461, 0.0
        %1463 = vadd.xlane.f32.xlu0 %v1462
        %v1464 = vpop.xlane.xlu0 %1463
        %v1465 = vmul.f32 %v1464, %v1276
        %v1466 = vadd.f32 %v1465, 1e-05
        %v1467 = vrsqrt.pop %v1466
        %v1468 = vmul.f32 %v1460, %v1467
        %v1470 = vlaneseq
        %v1471 = vshrl.u32 %v1470, 7
        %v1472 = vsub.s32 0, %v1471
        %v1473 = vrot.slane %v1454, %v1472
        %v1475 = vmul.f32 %v1468, %v1473
        %v1477 = vlaneseq
        %v1478 = vshrl.u32 %v1477, 7
        %v1479 = vsub.s32 0, %v1478
        %v1480 = vrot.slane %v1455, %v1479
        %v1482 = vadd.f32 %v1475, %v1480
        %1483 = vst.msk [vmem:[%s592] sm:$0xff] %vm629, %v1482
        %s1484 = sand.u32 %s387, 1
        %s1485 = scalar_lea.sflag [#allocation4], %s1484
        %s1486 = sand.u32 %s387, 1
        %s1487 = smul.addr %s1486, 8
        %s1488 = scalar_lea.vmem [#allocation11], %s1487
        // Predicated region
        $region105: #{tpu_custom_call.1} parent=83 // pred_check
          %p1489 = pneg %p397
        $region106: #{tpu_custom_call.1} parent=83 // pred_check_branch
          %1491 = sbr.rel (%p1489) target = $region108
        $region107: #{tpu_custom_call.1} parent=83 // pred_region
          %s1493 = ssub.s32 128, 128
          %1494 = vsyncadd %s1485, %s1493
          %s1495 = smul.addr %s33, 128
          %s1496 = scalar_lea.hbm %s16, %s1495
          %s1498 = sshll.u32 %s1488, 4
          %s1499 = int_to_ptr.vmem [resolvable:$true] %s1498
          %1501 = dma.vmem_to_hbm [thread:$0]  %s1499, 128, %s1496, %s1485
        $region108: #{tpu_custom_call.1} parent=83 // pred_fallthru
          _
      $region84: #{tpu_custom_call.1} parent=5 // pred_fallthru
        _
      %p1502 = scmp.le.s32.totalorder 2, %s28
      // Predicated region
      $region109: #{tpu_custom_call.1} parent=5 // pred_check
        %p1503 = pneg %p1502
      $region110: #{tpu_custom_call.1} parent=5 // pred_check_branch
        %1505 = sbr.rel (%p1503) target = $region112
      $region111: #{tpu_custom_call.1} parent=5 // pred_region
        %s1506 = ssub.s32 %s28, 2
        // Predicated region
        $region113: #{tpu_custom_call.1} parent=111 // pred_check
          %p1507 = pneg %p403
        $region114: #{tpu_custom_call.1} parent=111 // pred_check_branch
          %1509 = sbr.rel (%p1507) target = $region116
        $region115: #{tpu_custom_call.1} parent=111 // pred_region
          %s1510 = sand.u32 %s388, 1
          %s1511 = scalar_lea.sflag [#allocation4], %s1510
          %s1512 = sand.u32 %s388, 1
          %s1513 = smul.addr %s1512, 8
          %s1514 = scalar_lea.vmem [#allocation11], %s1513
          %1515 = dma.done %s1511, 128
        $region116: #{tpu_custom_call.1} parent=111 // pred_fallthru
          _
      $region112: #{tpu_custom_call.1} parent=5 // pred_fallthru
        _
    $region6: #{tpu_custom_call.1} parent=1 // loop_footer
      %s32 = sadd.s32 1, %s28
    $region7: #{tpu_custom_call.1} parent=1 // loop_footer_branch
      %27 = sbr.rel target = $region3
    $region8: #{tpu_custom_call.1} parent=1 // loop_exit
      _
    %1516 = vsyncpa [#allocation3], 1
    %s1517 = scalar_lea.sflag [#allocation3], 1
    %1518 = vsyncpa %s1517, 1
    %1519 = vsyncpa [#allocation6], 1
    %1520 = vsyncpa [#allocation9], 1
    %1521 = vsyncpa [#allocation4], 1
    %s1522 = scalar_lea.sflag [#allocation4], 1
    %1523 = vsyncpa %s1522, 1

</llo_original>
